<compile_context>
chip_gen: v6e
topology: v6e:2x2x1
jax: 0.10.0
libtpu: 0.0.40
codegen_flags: <defaults>
</compile_context>

<pallas_src>
import jax
import jax.numpy as jnp
from jax.experimental import pallas as pl
from jax.experimental.pallas import tpu as pltpu


# ----------------------------------------------------------------------------
# Host-side operator matrices, conv border masks, small helpers
# ----------------------------------------------------------------------------
def bilinear_matrix(n_in, n_out):
    """Row-interpolation matrix for Upsample(scale=2, bilinear, align_corners=True)."""
    if n_in == 1:
        return jnp.ones((n_out, 1), jnp.float32)
    src = jnp.arange(n_out, dtype=jnp.float32) * (n_in - 1) / (n_out - 1)
    i0 = jnp.clip(jnp.floor(src).astype(jnp.int32), 0, n_in - 2)
    frac = src - i0.astype(jnp.float32)
    m = ((1.0 - frac)[:, None] * jax.nn.one_hot(i0, n_in, dtype=jnp.float32)
         + frac[:, None] * jax.nn.one_hot(i0 + 1, n_in, dtype=jnp.float32))
    return m.astype(jnp.float32)


def nearest_matrix(n_in, n_out):
    """Row-selection matrix for F.interpolate(mode='nearest')."""
    idx = jnp.floor(jnp.arange(n_out, dtype=jnp.float32) * (n_in / n_out))
    idx = jnp.clip(idx.astype(jnp.int32), 0, n_in - 1)
    return jax.nn.one_hot(idx, n_in, dtype=jnp.float32)


def conv3x3_border_masks(P, Q):
    """(9, 1, P*Q) masks: 1 where the shifted source pixel of tap (dy,dx) is in-bounds."""
    pq = jnp.arange(P * Q)
    pp, qq = pq // Q, pq % Q
    masks = []
    for dy in range(3):
        for dx in range(3):
            sp, sq = pp + (dy - 1), qq + (dx - 1)
            m = ((sp >= 0) & (sp < P) & (sq >= 0) & (sq < Q)).astype(jnp.float32)
            masks.append(m)
    return jnp.stack(masks).reshape(9, 1, P * Q)


def _block_diag(m, n):
    """n-fold block-diagonal replication of a 2-D matrix (batch folding)."""
    if n == 1:
        return m
    r, c = m.shape
    out = jnp.zeros((n * r, n * c), m.dtype)
    for i in range(n):
        out = out.at[i * r:(i + 1) * r, i * c:(i + 1) * c].set(m)
    return out


# ----------------------------------------------------------------------------
# Pallas kernel: one DecoderBlock forward on a (channels, pixels) tile.
# Channels (optionally batch-major stacked) live on sublanes, pixels on lanes,
# so every output store is lane-dense and the rolls/masks act per-image.
# ----------------------------------------------------------------------------
def make_block_kernel(Q, compute_dtype):
    def kernel(x_ref, skip_ref, ut_ref, nt_ref, mask_ref,
               w1_ref, b1_ref, w2_ref, wu_ref, o_ref):
        f32 = jnp.float32
        PQ = ut_ref.shape[1]
        cm = w1_ref.shape[1] // 3          # effective mid channels (x batch fold)

        # --- Upsample x2 bilinear (align_corners=True): one matmul ---
        xu = jnp.dot(x_ref[...], ut_ref[...], preferred_element_type=f32)
        xu_c = xu.astype(compute_dtype)

        # --- Conv2d 3x3 (padding=1, BN1 scale folded): 3 grouped tap matmuls ---
        # taps of each kernel row are stacked on M; per-tap slices are
        # sublane-aligned, then XLU lane roll + border mask (VPU) + accumulate.
        acc = jnp.zeros((cm, PQ), f32)
        for g in range(3):                 # kernel row, dy = g - 1
            yg = jnp.dot(w1_ref[g], xu_c, preferred_element_type=f32)  # (3*cm, PQ)
            for j in range(3):             # kernel col, dx = j - 1
                k = 3 * g + j
                off = (g - 1) * Q + (j - 1)
                vk = yg[j * cm:(j + 1) * cm]
                if off != 0:
                    vk = pltpu.roll(vk, shift=(-off) % PQ, axis=1)
                if k == 4:                 # center tap: mask is all-ones, skip it
                    acc = acc + vk
                else:
                    acc = acc + vk * mask_ref[k]

        # --- BN1 bias + ReLU ---
        h = jnp.maximum(acc + b1_ref[...], 0.0)

        # --- Conv2d 1x1 (BN2 scale folded; BN2 bias folded into the skip path) ---
        h2 = jnp.dot(w2_ref[...], h.astype(compute_dtype),
                     preferred_element_type=f32)

        # --- residual: Conv1x1(skip) with its bias + BN2 bias coming from the
        #     ones row appended to skip, then nearest-resize matmul ---
        up = jnp.dot(wu_ref[...], skip_ref[...], preferred_element_type=f32)
        up = jnp.dot(up.astype(compute_dtype), nt_ref[...],
                     preferred_element_type=f32)

        # --- add + ReLU, lane-dense store ---
        o_ref[...] = jnp.maximum(h2 + up, 0.0).astype(o_ref.dtype)

    return kernel


def decoder_block(x2d, skip2d, bp, *, B, fold):
    """x2d: (B*Cin, H*W); skip2d: (B*Cskip, H0*W0) -> (B*Cout, P*Q)."""
    Bf = B if fold else 1
    in_ch, mid, out_ch = bp['in_ch'], bp['mid'], bp['out_ch']
    cin_e, cm_e, cout_e = Bf * in_ch, Bf * mid, Bf * out_ch
    cskip = skip2d.shape[0] // B
    cskip_e = Bf * cskip
    HW, HW0 = x2d.shape[1], skip2d.shape[1]
    PQ = bp['P'] * bp['Q']

    kernel = make_block_kernel(bp['Q'], bp['compute_dtype'])
    grid = (1,) if fold else (B,)          # folded: single step; v7x: one TC per batch
    return pl.pallas_call(
        kernel,
        out_shape=jax.ShapeDtypeStruct((B * out_ch, PQ), bp['out_dtype']),
        grid=grid,
        in_specs=[
            pl.BlockSpec((cin_e, HW), lambda b: (b, 0)),              # x
            pl.BlockSpec((cskip_e, HW0), lambda b: (b, 0)),           # skip (+ones row)
            pl.BlockSpec((HW, PQ), lambda b: (0, 0)),                 # Ut (bilinear op)
            pl.BlockSpec((HW0, PQ), lambda b: (0, 0)),                # Nt (nearest op)
            pl.BlockSpec((9, 1, PQ), lambda b: (0, 0, 0)),            # border masks
            pl.BlockSpec((3, 3 * cm_e, cin_e), lambda b: (0, 0, 0)),  # w1 (grouped taps)
            pl.BlockSpec((cm_e, 1), lambda b: (0, 0)),                # BN1 bias
            pl.BlockSpec((cout_e, cm_e), lambda b: (0, 0)),           # w2 (BN2 folded)
            pl.BlockSpec((cout_e, cskip_e), lambda b: (0, 0)),        # wu (+bias column)
        ],
        out_specs=pl.BlockSpec((cout_e, PQ), lambda b: (b, 0)),
        compiler_params=pltpu.CompilerParams(
            dimension_semantics=("parallel",)),
    )(x2d, skip2d, bp['Ut'], bp['Nt'], bp['mask'],
      bp['w1g'], bp['b1'], bp['w2'], bp['wu'])


# ----------------------------------------------------------------------------
# Parameter init (deterministic, synthetic).  BatchNorm is inference-mode:
# running stats folded into per-channel scale/bias, scales folded into weights.
# ----------------------------------------------------------------------------
def init_decoder_params(key, dim, blocks, H, W, factor=2, eps=1e-5):
    params = []
    in_ch = dim
    h, w = H, W
    for out_ch in blocks:
        mid = out_ch // factor
        key, *ks = jax.random.split(key, 13)
        w1 = 0.1 * jax.random.normal(ks[0], (3, 3, in_ch, mid), jnp.float32)   # HWIO
        g1 = 1.0 + 0.1 * jax.random.normal(ks[1], (mid,), jnp.float32)
        be1 = 0.1 * jax.random.normal(ks[2], (mid,), jnp.float32)
        mu1 = 0.1 * jax.random.normal(ks[3], (mid,), jnp.float32)
        v1 = 1.0 + 0.5 * jax.random.uniform(ks[4], (mid,), jnp.float32)
        w2 = 0.1 * jax.random.normal(ks[5], (mid, out_ch), jnp.float32)
        g2 = 1.0 + 0.1 * jax.random.normal(ks[6], (out_ch,), jnp.float32)
        be2 = 0.1 * jax.random.normal(ks[7], (out_ch,), jnp.float32)
        mu2 = 0.1 * jax.random.normal(ks[8], (out_ch,), jnp.float32)
        v2 = 1.0 + 0.5 * jax.random.uniform(ks[9], (out_ch,), jnp.float32)
        wu = 0.1 * jax.random.normal(ks[10], (dim, out_ch), jnp.float32)
        bu = 0.1 * jax.random.normal(ks[11], (out_ch,), jnp.float32)

        s1 = g1 / jnp.sqrt(v1 + eps)
        bb1 = be1 - mu1 * s1
        s2 = g2 / jnp.sqrt(v2 + eps)
        bb2 = be2 - mu2 * s2
        P, Q = 2 * h, 2 * w

        # kernel-ready math pieces (channels-first, BN scales folded into weights)
        w1k = jnp.transpose((w1 * s1).reshape(9, in_ch, mid), (0, 2, 1))  # (9, mid, in)
        w2k = (w2 * s2).T                                                 # (out, mid)
        wuk = wu.T                                                        # (out, dim)
        Ut = jnp.kron(bilinear_matrix(h, P), bilinear_matrix(w, Q)).T     # (h*w, P*Q)
        Nt = jnp.kron(nearest_matrix(H, P), nearest_matrix(W, Q)).T       # (H*W, P*Q)

        params.append(dict(
            # raw pieces (used only by the independent reference)
            w1=w1, s1=s1, bb1=bb1, w2=w2, s2=s2, bb2=bb2, wu=wu, bu=bu,
            # kernel math pieces
            w1k=w1k, w2k=w2k, wuk=wuk,
            Ut=Ut, Nt=Nt, mask=conv3x3_border_masks(P, Q),
            out_hw=(P, Q), in_ch=in_ch, mid=mid, out_ch=out_ch,
        ))
        in_ch = out_ch
        h, w = P, Q
    return params


def prepare_decoder(params, B, *, fold_batch, compute_dtype=jnp.float32,
                    final_dtype=jnp.float32):
    """Bake kernel-ready operands once (per device-mode / dtype):
      - stack the 3x3 taps 3-per-matmul on the M axis,
      - fold the batch onto the channel axis via block-diagonal weights,
      - merge Conv1x1 bias + BN2 bias into an extra `wu` column (consumed by a
        ones row appended to skip),
      - pre-cast all matmul operands to compute_dtype (no per-call astype)."""
    Bf = B if fold_batch else 1
    dim = params[0]['in_ch']
    cskip = ((dim + 1 + 7) // 8) * 8       # skip channels + ones row, 8-aligned
    blocks = []
    for i, p in enumerate(params):
        mid, out_ch = p['mid'], p['out_ch']
        b_out = p['bb2'] + p['bu']         # BN2 bias + residual-conv bias, merged
        wu_aug = jnp.concatenate(
            [p['wuk'], b_out[:, None],
             jnp.zeros((out_ch, cskip - dim - 1), jnp.float32)], axis=1)
        w1g = jnp.stack([
            jnp.concatenate(
                [_block_diag(p['w1k'][3 * g + j], Bf) for j in range(3)], axis=0)
            for g in range(3)])            # (3, 3*Bf*mid, Bf*in)
        blocks.append(dict(
            w1g=w1g.astype(compute_dtype),
            b1=jnp.tile(p['bb1'], Bf).reshape(Bf * mid, 1),
            w2=_block_diag(p['w2k'], Bf).astype(compute_dtype),
            wu=_block_diag(wu_aug, Bf).astype(compute_dtype),
            Ut=p['Ut'].astype(compute_dtype),
            Nt=p['Nt'].astype(compute_dtype),
            mask=p['mask'],
            P=p['out_hw'][0], Q=p['out_hw'][1],
            in_ch=p['in_ch'], mid=mid, out_ch=out_ch,
            out_dtype=(final_dtype if i == len(params) - 1 else compute_dtype),
            compute_dtype=compute_dtype,
        ))
    return dict(blocks=blocks, B=B, fold=fold_batch, cskip=cskip, dim=dim,
                compute_dtype=compute_dtype)


def decoder_forward(x_nchw, dec):
    B, C, H, W = x_nchw.shape
    assert B == dec['B'] and C == dec['dim']
    cdt = dec['compute_dtype']
    HW0 = H * W
    # skip = decoder input, plus a ones row (feeds the folded biases) and a
    # zero pad so the per-batch skip channel count is sublane (8) aligned.
    skip = x_nchw.reshape(B, C, HW0)
    skip_aug = jnp.concatenate(
        [skip, jnp.ones((B, 1, HW0), jnp.float32),
         jnp.zeros((B, dec['cskip'] - C - 1, HW0), jnp.float32)], axis=1)
    skip2d = skip_aug.reshape(B * dec['cskip'], HW0).astype(cdt)
    y = x_nchw.reshape(B * C, HW0).astype(cdt)
    for bp in dec['blocks']:
        y = decoder_block(y, skip2d, bp, B=B, fold=dec['fold'])
    P, Q = dec['blocks'][-1]['P'], dec['blocks'][-1]['Q']
    return y.reshape(B, -1, P, Q)


# ----------------------------------------------------------------------------
# Pure-JAX reference (independent: lax conv, unfolded BN, NCHW)
# ----------------------------------------------------------------------------
def decoder_reference(x_nchw, params):
    skip = x_nchw
    y = x_nchw
    for p in params:
        B, cin, h, w = y.shape
        P, Q = p['out_hw']
        Lh, Lw = bilinear_matrix(h, P), bilinear_matrix(w, Q)
        xu = jnp.einsum('ph,bchw->bcpw', Lh, y)
        xu = jnp.einsum('qw,bcpw->bcpq', Lw, xu)
        hh = jax.lax.conv_general_dilated(
            xu, p['w1'], (1, 1), 'SAME',
            dimension_numbers=('NCHW', 'HWIO', 'NCHW'))
        hh = hh * p['s1'][None, :, None, None] + p['bb1'][None, :, None, None]
        hh = jnp.maximum(hh, 0.0)
        hh = jnp.einsum('bmpq,mo->bopq', hh, p['w2'])
        hh = hh * p['s2'][None, :, None, None] + p['bb2'][None, :, None, None]
        up = jnp.einsum('bchw,co->bohw', skip, p['wu']) + p['bu'][None, :, None, None]
        Nh = nearest_matrix(skip.shape[2], P)
        Nw = nearest_matrix(skip.shape[3], Q)
        up = jnp.einsum('ph,bohw->bopw', Nh, up)
        up = jnp.einsum('qw,bopw->bopq', Nw, up)
        y = jnp.maximum(hh + up, 0.0)
    return y


def pick_fold_batch():
    """Fold the batch into one kernel step on single-TC chips (v5e/v6e);
    keep grid=(B,) parallel on v7x so each TensorCore gets a batch element."""
    try:
        kind = jax.devices()[0].device_kind.lower()
    except Exception:
        return True
    return 'v7' not in kind


# ----------------------------------------------------------------------------
if __name__ == "__main__":
    key = jax.random.PRNGKey(0)
    B, dim, H, W = 2, 32, 8, 8          # Decoder(dim=32, blocks=[32, 16])
    blocks = [32, 16]

    kx, kp = jax.random.split(key)
    x = jax.random.normal(kx, (B, dim, H, W), jnp.float32)   # NCHW (like PyTorch)
    params = init_decoder_params(kp, dim, blocks, H, W, factor=2)

    ref = decoder_reference(x, params)

    # f32 path — exercise both batch mappings (folded single step; per-batch grid)
    for fold in (True, False):
        dec = prepare_decoder(params, B, fold_batch=fold,
                              compute_dtype=jnp.float32)
        out = jax.block_until_ready(decoder_forward(x, dec))
        assert out.shape == ref.shape == (B, blocks[-1], 4 * H, 4 * W), out.shape
        err = float(jnp.max(jnp.abs(out - ref)))
        assert err < 2e-3, f"f32 fold={fold} max abs error {err}"

    # bf16 MXU operands, f32 accumulate (v6e/v7x fast path), bf16 intermediate
    # block outputs, f32 final output; batch mapping picked for the local chip.
    dec_bf16 = prepare_decoder(params, B, fold_batch=pick_fold_batch(),
                               compute_dtype=jnp.bfloat16,
                               final_dtype=jnp.float32)
    out_bf16 = jax.block_until_ready(decoder_forward(x, dec_bf16))
    scale = float(jnp.max(jnp.abs(ref)))
    err_bf16 = float(jnp.max(jnp.abs(out_bf16 - ref)))
    assert err_bf16 < 6e-2 * scale + 2e-2, \
        f"bf16 max abs error {err_bf16} (scale {scale})"

    print("KERNEL_OK")
</pallas_src>

<mosaic_0001>
module attributes {stable_mosaic.version = 11 : i64} {
  func.func @kernel(%arg0: i32, %arg1: memref<64x64xf32, #tpu.memory_space<vmem>>, %arg2: memref<80x64xf32, #tpu.memory_space<vmem>>, %arg3: memref<64x256xf32, #tpu.memory_space<vmem>>, %arg4: memref<64x256xf32, #tpu.memory_space<vmem>>, %arg5: memref<9x1x256xf32, #tpu.memory_space<vmem>>, %arg6: memref<3x96x64xf32, #tpu.memory_space<vmem>>, %arg7: memref<32x1xf32, #tpu.memory_space<vmem>>, %arg8: memref<64x32xf32, #tpu.memory_space<vmem>>, %arg9: memref<64x80xf32, #tpu.memory_space<vmem>>, %arg10: memref<64x256xf32, #tpu.memory_space<vmem>>) attributes {dimension_semantics = [#tpu.dimension_semantics<parallel>], iteration_bounds = array<i64: 1>, scalar_prefetch = 0 : i64, scratch_operands = 0 : i64, tpu.core_type = #tpu.core_type<tc>, window_params = [{transform_indices = @transform_0, window_bounds = array<i64: 64, 64>}, {transform_indices = @transform_1, window_bounds = array<i64: 80, 64>}, {pipeline_mode = #tpu.pipeline_mode<synchronous>, transform_indices = @transform_2, window_bounds = array<i64: 64, 256>}, {pipeline_mode = #tpu.pipeline_mode<synchronous>, transform_indices = @transform_3, window_bounds = array<i64: 64, 256>}, {pipeline_mode = #tpu.pipeline_mode<synchronous>, transform_indices = @transform_4, window_bounds = array<i64: 9, 1, 256>}, {pipeline_mode = #tpu.pipeline_mode<synchronous>, transform_indices = @transform_5, window_bounds = array<i64: 3, 96, 64>}, {pipeline_mode = #tpu.pipeline_mode<synchronous>, transform_indices = @transform_6, window_bounds = array<i64: 32, 1>}, {pipeline_mode = #tpu.pipeline_mode<synchronous>, transform_indices = @transform_7, window_bounds = array<i64: 64, 32>}, {pipeline_mode = #tpu.pipeline_mode<synchronous>, transform_indices = @transform_8, window_bounds = array<i64: 64, 80>}, {transform_indices = @transform_9, window_bounds = array<i64: 64, 256>}]} {
    %c0 = arith.constant 0 : index
    %c0_0 = arith.constant 0 : index
    %0 = vector.load %arg1[%c0, %c0_0] : memref<64x64xf32, #tpu.memory_space<vmem>>, vector<64x64xf32>
    %c0_1 = arith.constant 0 : index
    %c0_2 = arith.constant 0 : index
    %1 = vector.load %arg3[%c0_1, %c0_2] : memref<64x256xf32, #tpu.memory_space<vmem>>, vector<64x256xf32>
    %cst = arith.constant dense<0.000000e+00> : vector<64x256xf32>
    %2 = tpu.matmul %0, %1, %cst {dimension_numbers = #tpu.dot_dimension_numbers<[1], [0], [0], [1], [0, 0, 1, 1], [], []>} : vector<64x64xf32>, vector<64x256xf32>, vector<64x256xf32> -> vector<64x256xf32>
    %cst_3 = arith.constant 0.000000e+00 : f32
    %3 = vector.broadcast %cst_3 : f32 to vector<32x256xf32>
    %c0_4 = arith.constant 0 : index
    %c0_5 = arith.constant 0 : index
    %c0_6 = arith.constant 0 : index
    %4 = vector.load %arg6[%c0_4, %c0_5, %c0_6] : memref<3x96x64xf32, #tpu.memory_space<vmem>>, vector<1x96x64xf32>
    %5 = vector.shape_cast %4 : vector<1x96x64xf32> to vector<96x64xf32>
    %cst_7 = arith.constant dense<0.000000e+00> : vector<96x256xf32>
    %6 = tpu.matmul %5, %2, %cst_7 {dimension_numbers = #tpu.dot_dimension_numbers<[1], [0], [0], [1], [0, 0, 1, 1], [], []>} : vector<96x64xf32>, vector<64x256xf32>, vector<96x256xf32> -> vector<96x256xf32>
    %7 = vector.extract_strided_slice %6 {offsets = [0, 0], sizes = [32, 256], strides = [1, 1]} : vector<96x256xf32> to vector<32x256xf32>
    %c17_i32 = arith.constant 17 : i32
    %8 = tpu.dynamic_rotate %7 by %c17_i32 dim 1 : vector<32x256xf32>, i32 -> vector<32x256xf32>
    %c0_8 = arith.constant 0 : index
    %c0_9 = arith.constant 0 : index
    %c0_10 = arith.constant 0 : index
    %9 = vector.load %arg5[%c0_8, %c0_9, %c0_10] : memref<9x1x256xf32, #tpu.memory_space<vmem>>, vector<1x1x256xf32>
    %10 = vector.shape_cast %9 : vector<1x1x256xf32> to vector<1x256xf32>
    %11 = vector.broadcast %10 : vector<1x256xf32> to vector<32x256xf32>
    %12 = arith.mulf %8, %11 : vector<32x256xf32>
    %13 = arith.addf %3, %12 : vector<32x256xf32>
    %14 = vector.extract_strided_slice %6 {offsets = [32, 0], sizes = [32, 256], strides = [1, 1]} : vector<96x256xf32> to vector<32x256xf32>
    %c16_i32 = arith.constant 16 : i32
    %15 = tpu.dynamic_rotate %14 by %c16_i32 dim 1 : vector<32x256xf32>, i32 -> vector<32x256xf32>
    %c1 = arith.constant 1 : index
    %c0_11 = arith.constant 0 : index
    %c0_12 = arith.constant 0 : index
    %16 = vector.load %arg5[%c1, %c0_11, %c0_12] : memref<9x1x256xf32, #tpu.memory_space<vmem>>, vector<1x1x256xf32>
    %17 = vector.shape_cast %16 : vector<1x1x256xf32> to vector<1x256xf32>
    %18 = vector.broadcast %17 : vector<1x256xf32> to vector<32x256xf32>
    %19 = arith.mulf %15, %18 : vector<32x256xf32>
    %20 = arith.addf %13, %19 : vector<32x256xf32>
    %21 = vector.extract_strided_slice %6 {offsets = [64, 0], sizes = [32, 256], strides = [1, 1]} : vector<96x256xf32> to vector<32x256xf32>
    %c15_i32 = arith.constant 15 : i32
    %22 = tpu.dynamic_rotate %21 by %c15_i32 dim 1 : vector<32x256xf32>, i32 -> vector<32x256xf32>
    %c2 = arith.constant 2 : index
    %c0_13 = arith.constant 0 : index
    %c0_14 = arith.constant 0 : index
    %23 = vector.load %arg5[%c2, %c0_13, %c0_14] : memref<9x1x256xf32, #tpu.memory_space<vmem>>, vector<1x1x256xf32>
    %24 = vector.shape_cast %23 : vector<1x1x256xf32> to vector<1x256xf32>
    %25 = vector.broadcast %24 : vector<1x256xf32> to vector<32x256xf32>
    %26 = arith.mulf %22, %25 : vector<32x256xf32>
    %27 = arith.addf %20, %26 : vector<32x256xf32>
    %c1_15 = arith.constant 1 : index
    %c0_16 = arith.constant 0 : index
    %c0_17 = arith.constant 0 : index
    %28 = vector.load %arg6[%c1_15, %c0_16, %c0_17] : memref<3x96x64xf32, #tpu.memory_space<vmem>>, vector<1x96x64xf32>
    %29 = vector.shape_cast %28 : vector<1x96x64xf32> to vector<96x64xf32>
    %cst_18 = arith.constant dense<0.000000e+00> : vector<96x256xf32>
    %30 = tpu.matmul %29, %2, %cst_18 {dimension_numbers = #tpu.dot_dimension_numbers<[1], [0], [0], [1], [0, 0, 1, 1], [], []>} : vector<96x64xf32>, vector<64x256xf32>, vector<96x256xf32> -> vector<96x256xf32>
    %31 = vector.extract_strided_slice %30 {offsets = [0, 0], sizes = [32, 256], strides = [1, 1]} : vector<96x256xf32> to vector<32x256xf32>
    %c1_i32 = arith.constant 1 : i32
    %32 = tpu.dynamic_rotate %31 by %c1_i32 dim 1 : vector<32x256xf32>, i32 -> vector<32x256xf32>
    %c3 = arith.constant 3 : index
    %c0_19 = arith.constant 0 : index
    %c0_20 = arith.constant 0 : index
    %33 = vector.load %arg5[%c3, %c0_19, %c0_20] : memref<9x1x256xf32, #tpu.memory_space<vmem>>, vector<1x1x256xf32>
    %34 = vector.shape_cast %33 : vector<1x1x256xf32> to vector<1x256xf32>
    %35 = vector.broadcast %34 : vector<1x256xf32> to vector<32x256xf32>
    %36 = arith.mulf %32, %35 : vector<32x256xf32>
    %37 = arith.addf %27, %36 : vector<32x256xf32>
    %38 = vector.extract_strided_slice %30 {offsets = [32, 0], sizes = [32, 256], strides = [1, 1]} : vector<96x256xf32> to vector<32x256xf32>
    %39 = arith.addf %37, %38 : vector<32x256xf32>
    %40 = vector.extract_strided_slice %30 {offsets = [64, 0], sizes = [32, 256], strides = [1, 1]} : vector<96x256xf32> to vector<32x256xf32>
    %c255_i32 = arith.constant 255 : i32
    %41 = tpu.dynamic_rotate %40 by %c255_i32 dim 1 : vector<32x256xf32>, i32 -> vector<32x256xf32>
    %c5 = arith.constant 5 : index
    %c0_21 = arith.constant 0 : index
    %c0_22 = arith.constant 0 : index
    %42 = vector.load %arg5[%c5, %c0_21, %c0_22] : memref<9x1x256xf32, #tpu.memory_space<vmem>>, vector<1x1x256xf32>
    %43 = vector.shape_cast %42 : vector<1x1x256xf32> to vector<1x256xf32>
    %44 = vector.broadcast %43 : vector<1x256xf32> to vector<32x256xf32>
    %45 = arith.mulf %41, %44 : vector<32x256xf32>
    %46 = arith.addf %39, %45 : vector<32x256xf32>
    %c2_23 = arith.constant 2 : index
    %c0_24 = arith.constant 0 : index
    %c0_25 = arith.constant 0 : index
    %47 = vector.load %arg6[%c2_23, %c0_24, %c0_25] : memref<3x96x64xf32, #tpu.memory_space<vmem>>, vector<1x96x64xf32>
    %48 = vector.shape_cast %47 : vector<1x96x64xf32> to vector<96x64xf32>
    %cst_26 = arith.constant dense<0.000000e+00> : vector<96x256xf32>
    %49 = tpu.matmul %48, %2, %cst_26 {dimension_numbers = #tpu.dot_dimension_numbers<[1], [0], [0], [1], [0, 0, 1, 1], [], []>} : vector<96x64xf32>, vector<64x256xf32>, vector<96x256xf32> -> vector<96x256xf32>
    %50 = vector.extract_strided_slice %49 {offsets = [0, 0], sizes = [32, 256], strides = [1, 1]} : vector<96x256xf32> to vector<32x256xf32>
    %c241_i32 = arith.constant 241 : i32
    %51 = tpu.dynamic_rotate %50 by %c241_i32 dim 1 : vector<32x256xf32>, i32 -> vector<32x256xf32>
    %c6 = arith.constant 6 : index
    %c0_27 = arith.constant 0 : index
    %c0_28 = arith.constant 0 : index
    %52 = vector.load %arg5[%c6, %c0_27, %c0_28] : memref<9x1x256xf32, #tpu.memory_space<vmem>>, vector<1x1x256xf32>
    %53 = vector.shape_cast %52 : vector<1x1x256xf32> to vector<1x256xf32>
    %54 = vector.broadcast %53 : vector<1x256xf32> to vector<32x256xf32>
    %55 = arith.mulf %51, %54 : vector<32x256xf32>
    %56 = arith.addf %46, %55 : vector<32x256xf32>
    %57 = vector.extract_strided_slice %49 {offsets = [32, 0], sizes = [32, 256], strides = [1, 1]} : vector<96x256xf32> to vector<32x256xf32>
    %c240_i32 = arith.constant 240 : i32
    %58 = tpu.dynamic_rotate %57 by %c240_i32 dim 1 : vector<32x256xf32>, i32 -> vector<32x256xf32>
    %c7 = arith.constant 7 : index
    %c0_29 = arith.constant 0 : index
    %c0_30 = arith.constant 0 : index
    %59 = vector.load %arg5[%c7, %c0_29, %c0_30] : memref<9x1x256xf32, #tpu.memory_space<vmem>>, vector<1x1x256xf32>
    %60 = vector.shape_cast %59 : vector<1x1x256xf32> to vector<1x256xf32>
    %61 = vector.broadcast %60 : vector<1x256xf32> to vector<32x256xf32>
    %62 = arith.mulf %58, %61 : vector<32x256xf32>
    %63 = arith.addf %56, %62 : vector<32x256xf32>
    %64 = vector.extract_strided_slice %49 {offsets = [64, 0], sizes = [32, 256], strides = [1, 1]} : vector<96x256xf32> to vector<32x256xf32>
    %c239_i32 = arith.constant 239 : i32
    %65 = tpu.dynamic_rotate %64 by %c239_i32 dim 1 : vector<32x256xf32>, i32 -> vector<32x256xf32>
    %c8 = arith.constant 8 : index
    %c0_31 = arith.constant 0 : index
    %c0_32 = arith.constant 0 : index
    %66 = vector.load %arg5[%c8, %c0_31, %c0_32] : memref<9x1x256xf32, #tpu.memory_space<vmem>>, vector<1x1x256xf32>
    %67 = vector.shape_cast %66 : vector<1x1x256xf32> to vector<1x256xf32>
    %68 = vector.broadcast %67 : vector<1x256xf32> to vector<32x256xf32>
    %69 = arith.mulf %65, %68 : vector<32x256xf32>
    %70 = arith.addf %63, %69 : vector<32x256xf32>
    %c0_33 = arith.constant 0 : index
    %c0_34 = arith.constant 0 : index
    %71 = vector.load %arg7[%c0_33, %c0_34] : memref<32x1xf32, #tpu.memory_space<vmem>>, vector<32x1xf32>
    %72 = vector.broadcast %71 : vector<32x1xf32> to vector<32x256xf32>
    %73 = arith.addf %70, %72 : vector<32x256xf32>
    %cst_35 = arith.constant 0.000000e+00 : f32
    %74 = vector.broadcast %cst_35 : f32 to vector<32x256xf32>
    %75 = arith.maximumf %73, %74 : vector<32x256xf32>
    %c0_36 = arith.constant 0 : index
    %c0_37 = arith.constant 0 : index
    %76 = vector.load %arg8[%c0_36, %c0_37] : memref<64x32xf32, #tpu.memory_space<vmem>>, vector<64x32xf32>
    %cst_38 = arith.constant dense<0.000000e+00> : vector<64x256xf32>
    %77 = tpu.matmul %76, %75, %cst_38 {dimension_numbers = #tpu.dot_dimension_numbers<[1], [0], [0], [1], [0, 0, 1, 1], [], []>} : vector<64x32xf32>, vector<32x256xf32>, vector<64x256xf32> -> vector<64x256xf32>
    %c0_39 = arith.constant 0 : index
    %c0_40 = arith.constant 0 : index
    %78 = vector.load %arg9[%c0_39, %c0_40] : memref<64x80xf32, #tpu.memory_space<vmem>>, vector<64x80xf32>
    %c0_41 = arith.constant 0 : index
    %c0_42 = arith.constant 0 : index
    %79 = vector.load %arg2[%c0_41, %c0_42] : memref<80x64xf32, #tpu.memory_space<vmem>>, vector<80x64xf32>
    %cst_43 = arith.constant dense<0.000000e+00> : vector<64x64xf32>
    %80 = tpu.matmul %78, %79, %cst_43 {dimension_numbers = #tpu.dot_dimension_numbers<[1], [0], [0], [1], [0, 0, 1, 1], [], []>} : vector<64x80xf32>, vector<80x64xf32>, vector<64x64xf32> -> vector<64x64xf32>
    %c0_44 = arith.constant 0 : index
    %c0_45 = arith.constant 0 : index
    %81 = vector.load %arg4[%c0_44, %c0_45] : memref<64x256xf32, #tpu.memory_space<vmem>>, vector<64x256xf32>
    %cst_46 = arith.constant dense<0.000000e+00> : vector<64x256xf32>
    %82 = tpu.matmul %80, %81, %cst_46 {dimension_numbers = #tpu.dot_dimension_numbers<[1], [0], [0], [1], [0, 0, 1, 1], [], []>} : vector<64x64xf32>, vector<64x256xf32>, vector<64x256xf32> -> vector<64x256xf32>
    %83 = arith.addf %77, %82 : vector<64x256xf32>
    %cst_47 = arith.constant 0.000000e+00 : f32
    %84 = vector.broadcast %cst_47 : f32 to vector<64x256xf32>
    %85 = arith.maximumf %83, %84 : vector<64x256xf32>
    %c0_48 = arith.constant 0 : index
    %c0_49 = arith.constant 0 : index
    %86 = vector.load %arg10[%c0_48, %c0_49] : memref<64x256xf32, #tpu.memory_space<vmem>>, vector<64x256xf32>
    tpu.vector_store %arg10[%c0_48, %c0_49], %85 {strides = array<i32>} : memref<64x256xf32, #tpu.memory_space<vmem>>, vector<64x256xf32>,
    return
  }
  func.func @transform_0(%arg0: i32) -> (i32, i32) {
    %c0_i32 = arith.constant 0 : i32
    %c0_i32_0 = arith.constant 0 : i32
    return %arg0, %c0_i32 : i32, i32
  }
  func.func @transform_1(%arg0: i32) -> (i32, i32) {
    %c0_i32 = arith.constant 0 : i32
    %c0_i32_0 = arith.constant 0 : i32
    return %arg0, %c0_i32 : i32, i32
  }
  func.func @transform_2(%arg0: i32) -> (i32, i32) {
    %c0_i32 = arith.constant 0 : i32
    %c0_i32_0 = arith.constant 0 : i32
    %c0_i32_1 = arith.constant 0 : i32
    return %c0_i32, %c0_i32_0 : i32, i32
  }
  func.func @transform_3(%arg0: i32) -> (i32, i32) {
    %c0_i32 = arith.constant 0 : i32
    %c0_i32_0 = arith.constant 0 : i32
    %c0_i32_1 = arith.constant 0 : i32
    return %c0_i32, %c0_i32_0 : i32, i32
  }
  func.func @transform_4(%arg0: i32) -> (i32, i32, i32) {
    %c0_i32 = arith.constant 0 : i32
    %c0_i32_0 = arith.constant 0 : i32
    %c0_i32_1 = arith.constant 0 : i32
    %c0_i32_2 = arith.constant 0 : i32
    return %c0_i32, %c0_i32_0, %c0_i32_1 : i32, i32, i32
  }
  func.func @transform_5(%arg0: i32) -> (i32, i32, i32) {
    %c0_i32 = arith.constant 0 : i32
    %c0_i32_0 = arith.constant 0 : i32
    %c0_i32_1 = arith.constant 0 : i32
    %c0_i32_2 = arith.constant 0 : i32
    return %c0_i32, %c0_i32_0, %c0_i32_1 : i32, i32, i32
  }
  func.func @transform_6(%arg0: i32) -> (i32, i32) {
    %c0_i32 = arith.constant 0 : i32
    %c0_i32_0 = arith.constant 0 : i32
    %c0_i32_1 = arith.constant 0 : i32
    return %c0_i32, %c0_i32_0 : i32, i32
  }
  func.func @transform_7(%arg0: i32) -> (i32, i32) {
    %c0_i32 = arith.constant 0 : i32
    %c0_i32_0 = arith.constant 0 : i32
    %c0_i32_1 = arith.constant 0 : i32
    return %c0_i32, %c0_i32_0 : i32, i32
  }
  func.func @transform_8(%arg0: i32) -> (i32, i32) {
    %c0_i32 = arith.constant 0 : i32
    %c0_i32_0 = arith.constant 0 : i32
    %c0_i32_1 = arith.constant 0 : i32
    return %c0_i32, %c0_i32_0 : i32, i32
  }
  func.func @transform_9(%arg0: i32) -> (i32, i32) {
    %c0_i32 = arith.constant 0 : i32
    %c0_i32_0 = arith.constant 0 : i32
    return %arg0, %c0_i32 : i32, i32
  }
}

</mosaic_0001>

<llo_original>
// kernel: tpu_custom_call.1
$region0: #{tpu_custom_call.1}
  #allocation0 [shape = 'u32[]', space=smem, size = 0x4, offset = 0x4, fixed_abs, tag = 'smem constant byte address 0x4 - core index']
  #allocation1 [shape = 'u32[144,128]{1,0:T(1,128)}', space=vmem, size = 0x12000, scoped, tag = 'internal scratch']
  %s0 = inlined_call_operand.vmem [shape: f32[64,64], index: 0, kind: input, shape index: {}]
  %s1 = inlined_call_operand.vmem [shape: f32[80,64], index: 1, kind: input, shape index: {}]
  %s2 = inlined_call_operand.vmem [shape: f32[64,256], index: 2, kind: input, shape index: {}]
  %s3 = inlined_call_operand.vmem [shape: f32[64,256], index: 3, kind: input, shape index: {}]
  %s4 = inlined_call_operand.vmem [shape: f32[9,1,256], index: 4, kind: input, shape index: {}]
  %s5 = inlined_call_operand.vmem [shape: f32[3,96,64], index: 5, kind: input, shape index: {}]
  %s6 = inlined_call_operand.vmem [shape: f32[32,1], index: 6, kind: input, shape index: {}]
  %s7 = inlined_call_operand.vmem [shape: f32[64,32], index: 7, kind: input, shape index: {}]
  %s8 = inlined_call_operand.vmem [shape: f32[64,80], index: 8, kind: input, shape index: {}]
  %s9 = inlined_call_operand.hbm [shape: f32[64,256], index: 9, kind: output, shape index: {}]
  %s10 = sld [smem:[#allocation0]]
  $region46: #{tpu_custom_call.1} parent=0
    _
  %s12 = ssub.s32 1, %s10
  %s13 = scalar_select 0, %s12, %s10
  $region1: #{tpu_custom_call.1} parent=0
    #allocation2 [shape = 'u8[65536]{0}', space=vmem, size = 0x10000, scoped, tag = 'output window, operand 0, single buffered']
    #allocation3 [shape = 's32[1]{0}', space=sflag, size = 0x4, scoped, tag = 'scoped memory for tpu_custom_call.1']
    %14 = vsyncpa [#allocation3], 0
    // Predicated region
    $region2: #{tpu_custom_call.1} parent=1 // pred_check
      _
    $region3: #{tpu_custom_call.1} parent=1 // pred_check_branch
      %16 = sbr.rel (0) target = $region5
    $region4: #{tpu_custom_call.1} parent=1 // pred_region
      _
    $region5: #{tpu_custom_call.1} parent=1 // pred_fallthru
      _
    // Predicated region
    $region6: #{tpu_custom_call.1} parent=1 // pred_check
      _
    $region7: #{tpu_custom_call.1} parent=1 // pred_check_branch
      %18 = sbr.rel (0) target = $region9
    $region8: #{tpu_custom_call.1} parent=1 // pred_region
      _
    $region9: #{tpu_custom_call.1} parent=1 // pred_fallthru
      _
    // Predicated region
    $region10: #{tpu_custom_call.1} parent=1 // pred_check
      _
    $region11: #{tpu_custom_call.1} parent=1 // pred_check_branch
      %20 = sbr.rel (0) target = $region13
    $region12: #{tpu_custom_call.1} parent=1 // pred_region
      _
    $region13: #{tpu_custom_call.1} parent=1 // pred_fallthru
      _
    // Predicated region
    $region14: #{tpu_custom_call.1} parent=1 // pred_check
      _
    $region15: #{tpu_custom_call.1} parent=1 // pred_check_branch
      %22 = sbr.rel (0) target = $region17
    $region16: #{tpu_custom_call.1} parent=1 // pred_region
      _
    $region17: #{tpu_custom_call.1} parent=1 // pred_fallthru
      _
    // Predicated region
    $region18: #{tpu_custom_call.1} parent=1 // pred_check
      _
    $region19: #{tpu_custom_call.1} parent=1 // pred_check_branch
      %24 = sbr.rel (0) target = $region21
    $region20: #{tpu_custom_call.1} parent=1 // pred_region
      _
    $region21: #{tpu_custom_call.1} parent=1 // pred_fallthru
      _
    // Predicated region
    $region22: #{tpu_custom_call.1} parent=1 // pred_check
      _
    $region23: #{tpu_custom_call.1} parent=1 // pred_check_branch
      %26 = sbr.rel (0) target = $region25
    $region24: #{tpu_custom_call.1} parent=1 // pred_region
      _
    $region25: #{tpu_custom_call.1} parent=1 // pred_fallthru
      _
    // Predicated region
    $region26: #{tpu_custom_call.1} parent=1 // pred_check
      _
    $region27: #{tpu_custom_call.1} parent=1 // pred_check_branch
      %28 = sbr.rel (0) target = $region29
    $region28: #{tpu_custom_call.1} parent=1 // pred_region
      _
    $region29: #{tpu_custom_call.1} parent=1 // pred_fallthru
      _
    // Predicated region
    $region30: #{tpu_custom_call.1} parent=1 // pred_check
      _
    $region31: #{tpu_custom_call.1} parent=1 // pred_check_branch
      %30 = sbr.rel (0) target = $region33
    $region32: #{tpu_custom_call.1} parent=1 // pred_region
      _
    $region33: #{tpu_custom_call.1} parent=1 // pred_fallthru
      _
    // Predicated region
    $region34: #{tpu_custom_call.1} parent=1 // pred_check
      _
    $region35: #{tpu_custom_call.1} parent=1 // pred_check_branch
      %32 = sbr.rel (0) target = $region37
    $region36: #{tpu_custom_call.1} parent=1 // pred_region
      _
    $region37: #{tpu_custom_call.1} parent=1 // pred_fallthru
      _
    %v33 = vld [vmem:[%s0] sm:$0xff]
    %v34 = vld [vmem:[%s0 + $0x8] sm:$0xff]
    %v35 = vld [vmem:[%s0 + $0x10] sm:$0xff]
    %v36 = vld [vmem:[%s0 + $0x18] sm:$0xff]
    %v37 = vld [vmem:[%s0 + $0x20] sm:$0xff]
    %v38 = vld [vmem:[%s0 + $0x28] sm:$0xff]
    %v39 = vld [vmem:[%s0 + $0x30] sm:$0xff]
    %v40 = vld [vmem:[%s0 + $0x38] sm:$0xff]
    %v41 = vld [vmem:[%s2] sm:$0xff]
    %v42 = vld [vmem:[%s2 + $0x8] sm:$0xff]
    %v43 = vld [vmem:[%s2 + $0x10] sm:$0xff]
    %v44 = vld [vmem:[%s2 + $0x18] sm:$0xff]
    %v45 = vld [vmem:[%s2 + $0x20] sm:$0xff]
    %v46 = vld [vmem:[%s2 + $0x28] sm:$0xff]
    %v47 = vld [vmem:[%s2 + $0x30] sm:$0xff]
    %v48 = vld [vmem:[%s2 + $0x38] sm:$0xff]
    %v49 = vld [vmem:[%s2 + $0x40] sm:$0xff]
    %v50 = vld [vmem:[%s2 + $0x48] sm:$0xff]
    %v51 = vld [vmem:[%s2 + $0x50] sm:$0xff]
    %v52 = vld [vmem:[%s2 + $0x58] sm:$0xff]
    %v53 = vld [vmem:[%s2 + $0x60] sm:$0xff]
    %v54 = vld [vmem:[%s2 + $0x68] sm:$0xff]
    %v55 = vld [vmem:[%s2 + $0x70] sm:$0xff]
    %v56 = vld [vmem:[%s2 + $0x78] sm:$0xff]
    %vm57 = vcmask 523264
    %v59 = vsel %vm57, %v33, 0
    %v62 = vsel %vm57, %v34, 0
    %v65 = vsel %vm57, %v35, 0
    %v68 = vsel %vm57, %v36, 0
    %v71 = vsel %vm57, %v37, 0
    %v74 = vsel %vm57, %v38, 0
    %v77 = vsel %vm57, %v39, 0
    %v80 = vsel %vm57, %v40, 0
    %82 = vmatprep.subr.mxu0 0.0
    %83 = vmatpush1.msra.mxu0 0.0
    %84 = vmatprep.subr.mxu0 0.0
    %85 = vmatpush1.msra.mxu0 0.0
    %86 = vmatprep.subr.mxu0 0.0
    %87 = vmatpush1.msra.mxu0 0.0
    %88 = vmatprep.subr.mxu0 0.0
    %89 = vmatpush1.msra.mxu0 0.0
    %90 = vmatprep.subr.mxu0 0.0
    %91 = vmatpush1.msra.mxu0 0.0
    %92 = vmatprep.subr.mxu0 0.0
    %93 = vmatpush1.msra.mxu0 0.0
    %94 = vmatprep.subr.mxu0 0.0
    %95 = vmatpush1.msra.mxu0 0.0
    %96 = vmatprep.subr.mxu0 0.0
    %97 = vmatpush1.msra.mxu0 0.0
    %98 = vmatprep.subr.mxu0 %v56
    %99 = vmatpush1.msra.mxu0 %v55
    %100 = vmatprep.subr.mxu0 %v54
    %101 = vmatpush1.msra.mxu0 %v53
    %102 = vmatprep.subr.mxu0 %v52
    %103 = vmatpush1.msra.mxu0 %v51
    %104 = vmatprep.subr.mxu0 %v50
    %105 = vmatpush1.msra.mxu0 %v49
    %106 = vmatprep.subr.mxu0 %v48
    %107 = vmatpush1.msra.mxu0 %v47
    %108 = vmatprep.subr.mxu0 %v46
    %109 = vmatpush1.msra.mxu0 %v45
    %110 = vmatprep.subr.mxu0 %v44
    %111 = vmatpush1.msra.mxu0 %v43
    %112 = vmatprep.subr.mxu0 %v42
    %113 = vmatpush1.msra.mxu0 %v41
    %114 = vmatprep.subr.mxu0 0.0
    %115 = vmatpush2.msra.mxu0 0.0
    %116 = vmatprep.subr.mxu0 0.0
    %117 = vmatpush2.msra.mxu0 0.0
    %118 = vmatprep.subr.mxu0 0.0
    %119 = vmatpush2.msra.mxu0 0.0
    %120 = vmatprep.subr.mxu0 0.0
    %121 = vmatpush2.msra.mxu0 0.0
    %122 = vmatprep.subr.mxu0 0.0
    %123 = vmatpush2.msra.mxu0 0.0
    %124 = vmatprep.subr.mxu0 0.0
    %125 = vmatpush2.msra.mxu0 0.0
    %126 = vmatprep.subr.mxu0 0.0
    %127 = vmatpush2.msra.mxu0 0.0
    %128 = vmatprep.subr.mxu0 0.0
    %129 = vmatpush2.msra.mxu0 0.0
    %130 = vmatprep.subr.mxu0 0.0
    %131 = vmatpush2.msra.mxu0 0.0
    %132 = vmatprep.subr.mxu0 0.0
    %133 = vmatpush2.msra.mxu0 0.0
    %134 = vmatprep.subr.mxu0 0.0
    %135 = vmatpush2.msra.mxu0 0.0
    %136 = vmatprep.subr.mxu0 0.0
    %137 = vmatpush2.msra.mxu0 0.0
    %138 = vmatprep.subr.mxu0 0.0
    %139 = vmatpush2.msra.mxu0 0.0
    %140 = vmatprep.subr.mxu0 0.0
    %141 = vmatpush2.msra.mxu0 0.0
    %142 = vmatprep.subr.mxu0 0.0
    %143 = vmatpush2.msra.mxu0 0.0
    %144 = vmatprep.subr.mxu0 0.0
    %145 = vmatpush2.msra.mxu0 0.0
    %146 = vmatprep.mubr.f32.mxu0 0.0
    %147 = vmatmul.mubr.f32.gmra.mxu0 %v59
    %v148 = vpop.f32.mrf.mxu0
    %v149 = vadd.f32 0.0, %v148
    %v150 = vpop.f32.mrf.mxu0
    %v151 = vadd.f32 0.0, %v150
    %152 = vmatprep.mubr.f32.mxu0 0.0
    %153 = vmatmul.mubr.f32.gmra.mxu0 %v62
    %v154 = vpop.f32.mrf.mxu0
    %v155 = vadd.f32 0.0, %v154
    %v156 = vpop.f32.mrf.mxu0
    %v157 = vadd.f32 0.0, %v156
    %158 = vmatprep.mubr.f32.mxu0 0.0
    %159 = vmatmul.mubr.f32.gmra.mxu0 %v65
    %v160 = vpop.f32.mrf.mxu0
    %v161 = vadd.f32 0.0, %v160
    %v162 = vpop.f32.mrf.mxu0
    %v163 = vadd.f32 0.0, %v162
    %164 = vmatprep.mubr.f32.mxu0 0.0
    %165 = vmatmul.mubr.f32.gmra.mxu0 %v68
    %v166 = vpop.f32.mrf.mxu0
    %v167 = vadd.f32 0.0, %v166
    %v168 = vpop.f32.mrf.mxu0
    %v169 = vadd.f32 0.0, %v168
    %170 = vmatprep.mubr.f32.mxu0 0.0
    %171 = vmatmul.mubr.f32.gmra.mxu0 %v71
    %v172 = vpop.f32.mrf.mxu0
    %v173 = vadd.f32 0.0, %v172
    %v174 = vpop.f32.mrf.mxu0
    %v175 = vadd.f32 0.0, %v174
    %176 = vmatprep.mubr.f32.mxu0 0.0
    %177 = vmatmul.mubr.f32.gmra.mxu0 %v74
    %v178 = vpop.f32.mrf.mxu0
    %v179 = vadd.f32 0.0, %v178
    %v180 = vpop.f32.mrf.mxu0
    %v181 = vadd.f32 0.0, %v180
    %182 = vmatprep.mubr.f32.mxu0 0.0
    %183 = vmatmul.mubr.f32.gmra.mxu0 %v77
    %v184 = vpop.f32.mrf.mxu0
    %v185 = vadd.f32 0.0, %v184
    %v186 = vpop.f32.mrf.mxu0
    %v187 = vadd.f32 0.0, %v186
    %188 = vmatprep.mubr.f32.mxu0 0.0
    %189 = vmatmul.mubr.f32.gmra.mxu0 %v80
    %v190 = vpop.f32.mrf.mxu0
    %v191 = vadd.f32 0.0, %v190
    %v192 = vpop.f32.mrf.mxu0
    %v193 = vadd.f32 0.0, %v192
    %194 = vdwg.mxu0
    %v195 = vld [vmem:[%s5] sm:$0xff]
    %v196 = vld [vmem:[%s5 + $0x8] sm:$0xff]
    %v197 = vld [vmem:[%s5 + $0x10] sm:$0xff]
    %v198 = vld [vmem:[%s5 + $0x18] sm:$0xff]
    %v199 = vld [vmem:[%s5 + $0x20] sm:$0xff]
    %v200 = vld [vmem:[%s5 + $0x28] sm:$0xff]
    %v201 = vld [vmem:[%s5 + $0x30] sm:$0xff]
    %v202 = vld [vmem:[%s5 + $0x38] sm:$0xff]
    %v203 = vld [vmem:[%s5 + $0x40] sm:$0xff]
    %v204 = vld [vmem:[%s5 + $0x48] sm:$0xff]
    %v205 = vld [vmem:[%s5 + $0x50] sm:$0xff]
    %v206 = vld [vmem:[%s5 + $0x58] sm:$0xff]
    %v208 = vsel %vm57, %v195, 0
    %v211 = vsel %vm57, %v196, 0
    %v214 = vsel %vm57, %v197, 0
    %v217 = vsel %vm57, %v198, 0
    %v220 = vsel %vm57, %v199, 0
    %v223 = vsel %vm57, %v200, 0
    %v226 = vsel %vm57, %v201, 0
    %v229 = vsel %vm57, %v202, 0
    %v232 = vsel %vm57, %v203, 0
    %v235 = vsel %vm57, %v204, 0
    %v238 = vsel %vm57, %v205, 0
    %v241 = vsel %vm57, %v206, 0
    %243 = vmatprep.subr.mxu0 0.0
    %244 = vmatpush1.msra.mxu0 0.0
    %245 = vmatprep.subr.mxu0 0.0
    %246 = vmatpush1.msra.mxu0 0.0
    %247 = vmatprep.subr.mxu0 0.0
    %248 = vmatpush1.msra.mxu0 0.0
    %249 = vmatprep.subr.mxu0 0.0
    %250 = vmatpush1.msra.mxu0 0.0
    %251 = vmatprep.subr.mxu0 0.0
    %252 = vmatpush1.msra.mxu0 0.0
    %253 = vmatprep.subr.mxu0 0.0
    %254 = vmatpush1.msra.mxu0 0.0
    %255 = vmatprep.subr.mxu0 0.0
    %256 = vmatpush1.msra.mxu0 0.0
    %257 = vmatprep.subr.mxu0 0.0
    %258 = vmatpush1.msra.mxu0 0.0
    %259 = vmatprep.subr.mxu0 %v193
    %260 = vmatpush1.msra.mxu0 %v191
    %261 = vmatprep.subr.mxu0 %v187
    %262 = vmatpush1.msra.mxu0 %v185
    %263 = vmatprep.subr.mxu0 %v181
    %264 = vmatpush1.msra.mxu0 %v179
    %265 = vmatprep.subr.mxu0 %v175
    %266 = vmatpush1.msra.mxu0 %v173
    %267 = vmatprep.subr.mxu0 %v169
    %268 = vmatpush1.msra.mxu0 %v167
    %269 = vmatprep.subr.mxu0 %v163
    %270 = vmatpush1.msra.mxu0 %v161
    %271 = vmatprep.subr.mxu0 %v157
    %272 = vmatpush1.msra.mxu0 %v155
    %273 = vmatprep.subr.mxu0 %v151
    %274 = vmatpush1.msra.mxu0 %v149
    %275 = vmatprep.subr.mxu0 0.0
    %276 = vmatpush2.msra.mxu0 0.0
    %277 = vmatprep.subr.mxu0 0.0
    %278 = vmatpush2.msra.mxu0 0.0
    %279 = vmatprep.subr.mxu0 0.0
    %280 = vmatpush2.msra.mxu0 0.0
    %281 = vmatprep.subr.mxu0 0.0
    %282 = vmatpush2.msra.mxu0 0.0
    %283 = vmatprep.subr.mxu0 0.0
    %284 = vmatpush2.msra.mxu0 0.0
    %285 = vmatprep.subr.mxu0 0.0
    %286 = vmatpush2.msra.mxu0 0.0
    %287 = vmatprep.subr.mxu0 0.0
    %288 = vmatpush2.msra.mxu0 0.0
    %289 = vmatprep.subr.mxu0 0.0
    %290 = vmatpush2.msra.mxu0 0.0
    %291 = vmatprep.subr.mxu0 0.0
    %292 = vmatpush2.msra.mxu0 0.0
    %293 = vmatprep.subr.mxu0 0.0
    %294 = vmatpush2.msra.mxu0 0.0
    %295 = vmatprep.subr.mxu0 0.0
    %296 = vmatpush2.msra.mxu0 0.0
    %297 = vmatprep.subr.mxu0 0.0
    %298 = vmatpush2.msra.mxu0 0.0
    %299 = vmatprep.subr.mxu0 0.0
    %300 = vmatpush2.msra.mxu0 0.0
    %301 = vmatprep.subr.mxu0 0.0
    %302 = vmatpush2.msra.mxu0 0.0
    %303 = vmatprep.subr.mxu0 0.0
    %304 = vmatpush2.msra.mxu0 0.0
    %305 = vmatprep.subr.mxu0 0.0
    %306 = vmatpush2.msra.mxu0 0.0
    %307 = vmatprep.mubr.f32.mxu0 0.0
    %308 = vmatmul.mubr.f32.gmra.mxu0 %v208
    %v309 = vpop.f32.mrf.mxu0
    %v310 = vadd.f32 0.0, %v309
    %v311 = vpop.f32.mrf.mxu0
    %v312 = vadd.f32 0.0, %v311
    %313 = vmatprep.mubr.f32.mxu0 0.0
    %314 = vmatmul.mubr.f32.gmra.mxu0 %v211
    %v315 = vpop.f32.mrf.mxu0
    %v316 = vadd.f32 0.0, %v315
    %v317 = vpop.f32.mrf.mxu0
    %v318 = vadd.f32 0.0, %v317
    %319 = vmatprep.mubr.f32.mxu0 0.0
    %320 = vmatmul.mubr.f32.gmra.mxu0 %v214
    %v321 = vpop.f32.mrf.mxu0
    %v322 = vadd.f32 0.0, %v321
    %v323 = vpop.f32.mrf.mxu0
    %v324 = vadd.f32 0.0, %v323
    %325 = vmatprep.mubr.f32.mxu0 0.0
    %326 = vmatmul.mubr.f32.gmra.mxu0 %v217
    %v327 = vpop.f32.mrf.mxu0
    %v328 = vadd.f32 0.0, %v327
    %v329 = vpop.f32.mrf.mxu0
    %v330 = vadd.f32 0.0, %v329
    %331 = vmatprep.mubr.f32.mxu0 0.0
    %332 = vmatmul.mubr.f32.gmra.mxu0 %v220
    %v333 = vpop.f32.mrf.mxu0
    %v334 = vadd.f32 0.0, %v333
    %v335 = vpop.f32.mrf.mxu0
    %v336 = vadd.f32 0.0, %v335
    %337 = vmatprep.mubr.f32.mxu0 0.0
    %338 = vmatmul.mubr.f32.gmra.mxu0 %v223
    %v339 = vpop.f32.mrf.mxu0
    %v340 = vadd.f32 0.0, %v339
    %v341 = vpop.f32.mrf.mxu0
    %v342 = vadd.f32 0.0, %v341
    %343 = vmatprep.mubr.f32.mxu0 0.0
    %344 = vmatmul.mubr.f32.gmra.mxu0 %v226
    %v345 = vpop.f32.mrf.mxu0
    %v346 = vadd.f32 0.0, %v345
    %v347 = vpop.f32.mrf.mxu0
    %v348 = vadd.f32 0.0, %v347
    %349 = vmatprep.mubr.f32.mxu0 0.0
    %350 = vmatmul.mubr.f32.gmra.mxu0 %v229
    %v351 = vpop.f32.mrf.mxu0
    %v352 = vadd.f32 0.0, %v351
    %v353 = vpop.f32.mrf.mxu0
    %v354 = vadd.f32 0.0, %v353
    %355 = vmatprep.mubr.f32.mxu0 0.0
    %356 = vmatmul.mubr.f32.gmra.mxu0 %v232
    %v357 = vpop.f32.mrf.mxu0
    %v358 = vadd.f32 0.0, %v357
    %v359 = vpop.f32.mrf.mxu0
    %v360 = vadd.f32 0.0, %v359
    %361 = vmatprep.mubr.f32.mxu0 0.0
    %362 = vmatmul.mubr.f32.gmra.mxu0 %v235
    %v363 = vpop.f32.mrf.mxu0
    %v364 = vadd.f32 0.0, %v363
    %v365 = vpop.f32.mrf.mxu0
    %v366 = vadd.f32 0.0, %v365
    %367 = vmatprep.mubr.f32.mxu0 0.0
    %368 = vmatmul.mubr.f32.gmra.mxu0 %v238
    %v369 = vpop.f32.mrf.mxu0
    %v370 = vadd.f32 0.0, %v369
    %v371 = vpop.f32.mrf.mxu0
    %v372 = vadd.f32 0.0, %v371
    %373 = vmatprep.mubr.f32.mxu0 0.0
    %374 = vmatmul.mubr.f32.gmra.mxu0 %v241
    %v375 = vpop.f32.mrf.mxu0
    %v376 = vadd.f32 0.0, %v375
    %v377 = vpop.f32.mrf.mxu0
    %v378 = vadd.f32 0.0, %v377
    %379 = vdwg.mxu0
    %380 = vrot.lane.b32.xlu0 %v310, 17
    %v381 = vpop.permute.xlu0 %380
    %382 = vrot.lane.b32.xlu0 %v316, 17
    %v383 = vpop.permute.xlu0 %382
    %384 = vrot.lane.b32.xlu0 %v322, 17
    %v385 = vpop.permute.xlu0 %384
    %386 = vrot.lane.b32.xlu0 %v328, 17
    %v387 = vpop.permute.xlu0 %386
    %388 = vrot.lane.b32.xlu0 %v312, 17
    %v389 = vpop.permute.xlu0 %388
    %390 = vrot.lane.b32.xlu0 %v318, 17
    %v391 = vpop.permute.xlu0 %390
    %392 = vrot.lane.b32.xlu0 %v324, 17
    %v393 = vpop.permute.xlu0 %392
    %394 = vrot.lane.b32.xlu0 %v330, 17
    %v395 = vpop.permute.xlu0 %394
    %v396 = vlaneseq
    %v397 = vand.u32 %v396, 127
    %vm398 = vcmp.lt.s32.totalorder %v397, 17
    %v399 = vsel %vm398, %v381, %v389
    %v400 = vsel %vm398, %v383, %v391
    %v401 = vsel %vm398, %v385, %v393
    %v402 = vsel %vm398, %v387, %v395
    %v403 = vsel %vm398, %v389, %v381
    %v404 = vsel %vm398, %v391, %v383
    %v405 = vsel %vm398, %v393, %v385
    %v406 = vsel %vm398, %v395, %v387
    %v407 = vld [vmem:[%s4] sm:$0x3]
    %v409 = vlaneseq
    %v410 = vshrl.u32 %v409, 7
    %v411 = vsub.s32 0, %v410
    %v412 = vrot.slane %v407, %v411
    %v413 = vlaneseq
    %v414 = vshrl.u32 %v413, 7
    %v415 = vsub.s32 1, %v414
    %v416 = vrot.slane %v407, %v415
    %v419 = vmul.f32 %v403, %v412
    %v420 = vmul.f32 %v399, %v416
    %v421 = vmul.f32 %v404, %v412
    %v422 = vmul.f32 %v400, %v416
    %v423 = vmul.f32 %v405, %v412
    %v424 = vmul.f32 %v401, %v416
    %v425 = vmul.f32 %v406, %v412
    %v426 = vmul.f32 %v402, %v416
    %v427 = vadd.f32 %v419, 0.0
    %v428 = vadd.f32 %v420, 0.0
    %v429 = vadd.f32 %v421, 0.0
    %v430 = vadd.f32 %v422, 0.0
    %v431 = vadd.f32 %v423, 0.0
    %v432 = vadd.f32 %v424, 0.0
    %v433 = vadd.f32 %v425, 0.0
    %v434 = vadd.f32 %v426, 0.0
    %435 = vrot.lane.b32.xlu0 %v334, 16
    %v436 = vpop.permute.xlu0 %435
    %437 = vrot.lane.b32.xlu0 %v340, 16
    %v438 = vpop.permute.xlu0 %437
    %439 = vrot.lane.b32.xlu0 %v346, 16
    %v440 = vpop.permute.xlu0 %439
    %441 = vrot.lane.b32.xlu0 %v352, 16
    %v442 = vpop.permute.xlu0 %441
    %443 = vrot.lane.b32.xlu0 %v336, 16
    %v444 = vpop.permute.xlu0 %443
    %445 = vrot.lane.b32.xlu0 %v342, 16
    %v446 = vpop.permute.xlu0 %445
    %447 = vrot.lane.b32.xlu0 %v348, 16
    %v448 = vpop.permute.xlu0 %447
    %449 = vrot.lane.b32.xlu0 %v354, 16
    %v450 = vpop.permute.xlu0 %449
    %vm451 = vcmp.lt.s32.totalorder %v397, 16
    %v452 = vsel %vm451, %v436, %v444
    %v453 = vsel %vm451, %v438, %v446
    %v454 = vsel %vm451, %v440, %v448
    %v455 = vsel %vm451, %v442, %v450
    %v456 = vsel %vm451, %v444, %v436
    %v457 = vsel %vm451, %v446, %v438
    %v458 = vsel %vm451, %v448, %v440
    %v459 = vsel %vm451, %v450, %v442
    %s460 = scalar_lea.vmem %s4, 2
    %v461 = vld [vmem:[%s460] sm:$0x3]
    %v463 = vlaneseq
    %v464 = vshrl.u32 %v463, 7
    %v465 = vsub.s32 0, %v464
    %v466 = vrot.slane %v461, %v465
    %v467 = vlaneseq
    %v468 = vshrl.u32 %v467, 7
    %v469 = vsub.s32 1, %v468
    %v470 = vrot.slane %v461, %v469
    %v473 = vmul.f32 %v456, %v466
    %v474 = vmul.f32 %v452, %v470
    %v475 = vmul.f32 %v457, %v466
    %v476 = vmul.f32 %v453, %v470
    %v477 = vmul.f32 %v458, %v466
    %v478 = vmul.f32 %v454, %v470
    %v479 = vmul.f32 %v459, %v466
    %v480 = vmul.f32 %v455, %v470
    %v481 = vadd.f32 %v427, %v473
    %v482 = vadd.f32 %v428, %v474
    %v483 = vadd.f32 %v429, %v475
    %v484 = vadd.f32 %v430, %v476
    %v485 = vadd.f32 %v431, %v477
    %v486 = vadd.f32 %v432, %v478
    %v487 = vadd.f32 %v433, %v479
    %v488 = vadd.f32 %v434, %v480
    %489 = vrot.lane.b32.xlu0 %v358, 15
    %v490 = vpop.permute.xlu0 %489
    %491 = vrot.lane.b32.xlu0 %v364, 15
    %v492 = vpop.permute.xlu0 %491
    %493 = vrot.lane.b32.xlu0 %v370, 15
    %v494 = vpop.permute.xlu0 %493
    %495 = vrot.lane.b32.xlu0 %v376, 15
    %v496 = vpop.permute.xlu0 %495
    %497 = vrot.lane.b32.xlu0 %v360, 15
    %v498 = vpop.permute.xlu0 %497
    %499 = vrot.lane.b32.xlu0 %v366, 15
    %v500 = vpop.permute.xlu0 %499
    %501 = vrot.lane.b32.xlu0 %v372, 15
    %v502 = vpop.permute.xlu0 %501
    %503 = vrot.lane.b32.xlu0 %v378, 15
    %v504 = vpop.permute.xlu0 %503
    %vm505 = vcmp.lt.s32.totalorder %v397, 15
    %v506 = vsel %vm505, %v490, %v498
    %v507 = vsel %vm505, %v492, %v500
    %v508 = vsel %vm505, %v494, %v502
    %v509 = vsel %vm505, %v496, %v504
    %v510 = vsel %vm505, %v498, %v490
    %v511 = vsel %vm505, %v500, %v492
    %v512 = vsel %vm505, %v502, %v494
    %v513 = vsel %vm505, %v504, %v496
    %s514 = scalar_lea.vmem %s4, 4
    %v515 = vld [vmem:[%s514] sm:$0x3]
    %v517 = vlaneseq
    %v518 = vshrl.u32 %v517, 7
    %v519 = vsub.s32 0, %v518
    %v520 = vrot.slane %v515, %v519
    %v521 = vlaneseq
    %v522 = vshrl.u32 %v521, 7
    %v523 = vsub.s32 1, %v522
    %v524 = vrot.slane %v515, %v523
    %v527 = vmul.f32 %v510, %v520
    %v528 = vmul.f32 %v506, %v524
    %v529 = vmul.f32 %v511, %v520
    %v530 = vmul.f32 %v507, %v524
    %v531 = vmul.f32 %v512, %v520
    %v532 = vmul.f32 %v508, %v524
    %v533 = vmul.f32 %v513, %v520
    %v534 = vmul.f32 %v509, %v524
    %v535 = vadd.f32 %v481, %v527
    %v536 = vadd.f32 %v482, %v528
    %v537 = vadd.f32 %v483, %v529
    %v538 = vadd.f32 %v484, %v530
    %v539 = vadd.f32 %v485, %v531
    %v540 = vadd.f32 %v486, %v532
    %v541 = vadd.f32 %v487, %v533
    %v542 = vadd.f32 %v488, %v534
    %s543 = scalar_lea.vmem %s5, 96
    %v544 = vld [vmem:[%s543] sm:$0xff]
    %v545 = vld [vmem:[%s543 + $0x8] sm:$0xff]
    %v546 = vld [vmem:[%s543 + $0x10] sm:$0xff]
    %v547 = vld [vmem:[%s543 + $0x18] sm:$0xff]
    %v548 = vld [vmem:[%s543 + $0x20] sm:$0xff]
    %v549 = vld [vmem:[%s543 + $0x28] sm:$0xff]
    %v550 = vld [vmem:[%s543 + $0x30] sm:$0xff]
    %v551 = vld [vmem:[%s543 + $0x38] sm:$0xff]
    %v552 = vld [vmem:[%s543 + $0x40] sm:$0xff]
    %v553 = vld [vmem:[%s543 + $0x48] sm:$0xff]
    %v554 = vld [vmem:[%s543 + $0x50] sm:$0xff]
    %v555 = vld [vmem:[%s543 + $0x58] sm:$0xff]
    %v557 = vsel %vm57, %v544, 0
    %v560 = vsel %vm57, %v545, 0
    %v563 = vsel %vm57, %v546, 0
    %v566 = vsel %vm57, %v547, 0
    %v569 = vsel %vm57, %v548, 0
    %v572 = vsel %vm57, %v549, 0
    %v575 = vsel %vm57, %v550, 0
    %v578 = vsel %vm57, %v551, 0
    %v581 = vsel %vm57, %v552, 0
    %v584 = vsel %vm57, %v553, 0
    %v587 = vsel %vm57, %v554, 0
    %v590 = vsel %vm57, %v555, 0
    %592 = vmatprep.subr.mxu0 0.0
    %593 = vmatpush1.msra.mxu0 0.0
    %594 = vmatprep.subr.mxu0 0.0
    %595 = vmatpush1.msra.mxu0 0.0
    %596 = vmatprep.subr.mxu0 0.0
    %597 = vmatpush1.msra.mxu0 0.0
    %598 = vmatprep.subr.mxu0 0.0
    %599 = vmatpush1.msra.mxu0 0.0
    %600 = vmatprep.subr.mxu0 0.0
    %601 = vmatpush1.msra.mxu0 0.0
    %602 = vmatprep.subr.mxu0 0.0
    %603 = vmatpush1.msra.mxu0 0.0
    %604 = vmatprep.subr.mxu0 0.0
    %605 = vmatpush1.msra.mxu0 0.0
    %606 = vmatprep.subr.mxu0 0.0
    %607 = vmatpush1.msra.mxu0 0.0
    %608 = vmatprep.subr.mxu0 %v193
    %609 = vmatpush1.msra.mxu0 %v191
    %610 = vmatprep.subr.mxu0 %v187
    %611 = vmatpush1.msra.mxu0 %v185
    %612 = vmatprep.subr.mxu0 %v181
    %613 = vmatpush1.msra.mxu0 %v179
    %614 = vmatprep.subr.mxu0 %v175
    %615 = vmatpush1.msra.mxu0 %v173
    %616 = vmatprep.subr.mxu0 %v169
    %617 = vmatpush1.msra.mxu0 %v167
    %618 = vmatprep.subr.mxu0 %v163
    %619 = vmatpush1.msra.mxu0 %v161
    %620 = vmatprep.subr.mxu0 %v157
    %621 = vmatpush1.msra.mxu0 %v155
    %622 = vmatprep.subr.mxu0 %v151
    %623 = vmatpush1.msra.mxu0 %v149
    %624 = vmatprep.subr.mxu0 0.0
    %625 = vmatpush2.msra.mxu0 0.0
    %626 = vmatprep.subr.mxu0 0.0
    %627 = vmatpush2.msra.mxu0 0.0
    %628 = vmatprep.subr.mxu0 0.0
    %629 = vmatpush2.msra.mxu0 0.0
    %630 = vmatprep.subr.mxu0 0.0
    %631 = vmatpush2.msra.mxu0 0.0
    %632 = vmatprep.subr.mxu0 0.0
    %633 = vmatpush2.msra.mxu0 0.0
    %634 = vmatprep.subr.mxu0 0.0
    %635 = vmatpush2.msra.mxu0 0.0
    %636 = vmatprep.subr.mxu0 0.0
    %637 = vmatpush2.msra.mxu0 0.0
    %638 = vmatprep.subr.mxu0 0.0
    %639 = vmatpush2.msra.mxu0 0.0
    %640 = vmatprep.subr.mxu0 0.0
    %641 = vmatpush2.msra.mxu0 0.0
    %642 = vmatprep.subr.mxu0 0.0
    %643 = vmatpush2.msra.mxu0 0.0
    %644 = vmatprep.subr.mxu0 0.0
    %645 = vmatpush2.msra.mxu0 0.0
    %646 = vmatprep.subr.mxu0 0.0
    %647 = vmatpush2.msra.mxu0 0.0
    %648 = vmatprep.subr.mxu0 0.0
    %649 = vmatpush2.msra.mxu0 0.0
    %650 = vmatprep.subr.mxu0 0.0
    %651 = vmatpush2.msra.mxu0 0.0
    %652 = vmatprep.subr.mxu0 0.0
    %653 = vmatpush2.msra.mxu0 0.0
    %654 = vmatprep.subr.mxu0 0.0
    %655 = vmatpush2.msra.mxu0 0.0
    %656 = vmatprep.mubr.f32.mxu0 0.0
    %657 = vmatmul.mubr.f32.gmra.mxu0 %v557
    %v658 = vpop.f32.mrf.mxu0
    %v659 = vadd.f32 0.0, %v658
    %v660 = vpop.f32.mrf.mxu0
    %v661 = vadd.f32 0.0, %v660
    %662 = vmatprep.mubr.f32.mxu0 0.0
    %663 = vmatmul.mubr.f32.gmra.mxu0 %v560
    %v664 = vpop.f32.mrf.mxu0
    %v665 = vadd.f32 0.0, %v664
    %v666 = vpop.f32.mrf.mxu0
    %v667 = vadd.f32 0.0, %v666
    %668 = vmatprep.mubr.f32.mxu0 0.0
    %669 = vmatmul.mubr.f32.gmra.mxu0 %v563
    %v670 = vpop.f32.mrf.mxu0
    %v671 = vadd.f32 0.0, %v670
    %v672 = vpop.f32.mrf.mxu0
    %v673 = vadd.f32 0.0, %v672
    %674 = vmatprep.mubr.f32.mxu0 0.0
    %675 = vmatmul.mubr.f32.gmra.mxu0 %v566
    %v676 = vpop.f32.mrf.mxu0
    %v677 = vadd.f32 0.0, %v676
    %v678 = vpop.f32.mrf.mxu0
    %v679 = vadd.f32 0.0, %v678
    %680 = vmatprep.mubr.f32.mxu0 0.0
    %681 = vmatmul.mubr.f32.gmra.mxu0 %v569
    %v682 = vpop.f32.mrf.mxu0
    %v683 = vadd.f32 0.0, %v682
    %v684 = vpop.f32.mrf.mxu0
    %v685 = vadd.f32 0.0, %v684
    %686 = vmatprep.mubr.f32.mxu0 0.0
    %687 = vmatmul.mubr.f32.gmra.mxu0 %v572
    %v688 = vpop.f32.mrf.mxu0
    %v689 = vadd.f32 0.0, %v688
    %v690 = vpop.f32.mrf.mxu0
    %v691 = vadd.f32 0.0, %v690
    %692 = vmatprep.mubr.f32.mxu0 0.0
    %693 = vmatmul.mubr.f32.gmra.mxu0 %v575
    %v694 = vpop.f32.mrf.mxu0
    %v695 = vadd.f32 0.0, %v694
    %v696 = vpop.f32.mrf.mxu0
    %v697 = vadd.f32 0.0, %v696
    %698 = vmatprep.mubr.f32.mxu0 0.0
    %699 = vmatmul.mubr.f32.gmra.mxu0 %v578
    %v700 = vpop.f32.mrf.mxu0
    %v701 = vadd.f32 0.0, %v700
    %v702 = vpop.f32.mrf.mxu0
    %v703 = vadd.f32 0.0, %v702
    %704 = vmatprep.mubr.f32.mxu0 0.0
    %705 = vmatmul.mubr.f32.gmra.mxu0 %v581
    %v706 = vpop.f32.mrf.mxu0
    %v707 = vadd.f32 0.0, %v706
    %v708 = vpop.f32.mrf.mxu0
    %v709 = vadd.f32 0.0, %v708
    %710 = vmatprep.mubr.f32.mxu0 0.0
    %711 = vmatmul.mubr.f32.gmra.mxu0 %v584
    %v712 = vpop.f32.mrf.mxu0
    %v713 = vadd.f32 0.0, %v712
    %v714 = vpop.f32.mrf.mxu0
    %v715 = vadd.f32 0.0, %v714
    %716 = vmatprep.mubr.f32.mxu0 0.0
    %717 = vmatmul.mubr.f32.gmra.mxu0 %v587
    %v718 = vpop.f32.mrf.mxu0
    %v719 = vadd.f32 0.0, %v718
    %v720 = vpop.f32.mrf.mxu0
    %v721 = vadd.f32 0.0, %v720
    %722 = vmatprep.mubr.f32.mxu0 0.0
    %723 = vmatmul.mubr.f32.gmra.mxu0 %v590
    %v724 = vpop.f32.mrf.mxu0
    %v725 = vadd.f32 0.0, %v724
    %v726 = vpop.f32.mrf.mxu0
    %v727 = vadd.f32 0.0, %v726
    %728 = vdwg.mxu0
    %729 = vrot.lane.b32.xlu0 %v659, 1
    %v730 = vpop.permute.xlu0 %729
    %731 = vrot.lane.b32.xlu0 %v665, 1
    %v732 = vpop.permute.xlu0 %731
    %733 = vrot.lane.b32.xlu0 %v671, 1
    %v734 = vpop.permute.xlu0 %733
    %735 = vrot.lane.b32.xlu0 %v677, 1
    %v736 = vpop.permute.xlu0 %735
    %737 = vrot.lane.b32.xlu0 %v661, 1
    %v738 = vpop.permute.xlu0 %737
    %739 = vrot.lane.b32.xlu0 %v667, 1
    %v740 = vpop.permute.xlu0 %739
    %741 = vrot.lane.b32.xlu0 %v673, 1
    %v742 = vpop.permute.xlu0 %741
    %743 = vrot.lane.b32.xlu0 %v679, 1
    %v744 = vpop.permute.xlu0 %743
    %vm745 = vcmp.lt.s32.totalorder %v397, 1
    %v746 = vsel %vm745, %v730, %v738
    %v747 = vsel %vm745, %v732, %v740
    %v748 = vsel %vm745, %v734, %v742
    %v749 = vsel %vm745, %v736, %v744
    %v750 = vsel %vm745, %v738, %v730
    %v751 = vsel %vm745, %v740, %v732
    %v752 = vsel %vm745, %v742, %v734
    %v753 = vsel %vm745, %v744, %v736
    %s754 = scalar_lea.vmem %s4, 6
    %v755 = vld [vmem:[%s754] sm:$0x3]
    %v757 = vlaneseq
    %v758 = vshrl.u32 %v757, 7
    %v759 = vsub.s32 0, %v758
    %v760 = vrot.slane %v755, %v759
    %v761 = vlaneseq
    %v762 = vshrl.u32 %v761, 7
    %v763 = vsub.s32 1, %v762
    %v764 = vrot.slane %v755, %v763
    %v767 = vmul.f32 %v750, %v760
    %v768 = vmul.f32 %v746, %v764
    %v769 = vmul.f32 %v751, %v760
    %v770 = vmul.f32 %v747, %v764
    %v771 = vmul.f32 %v752, %v760
    %v772 = vmul.f32 %v748, %v764
    %v773 = vmul.f32 %v753, %v760
    %v774 = vmul.f32 %v749, %v764
    %v775 = vadd.f32 %v535, %v767
    %v776 = vadd.f32 %v536, %v768
    %v777 = vadd.f32 %v537, %v769
    %v778 = vadd.f32 %v538, %v770
    %v779 = vadd.f32 %v539, %v771
    %v780 = vadd.f32 %v540, %v772
    %v781 = vadd.f32 %v541, %v773
    %v782 = vadd.f32 %v542, %v774
    %v783 = vadd.f32 %v775, %v683
    %v784 = vadd.f32 %v776, %v685
    %v785 = vadd.f32 %v777, %v689
    %v786 = vadd.f32 %v778, %v691
    %v787 = vadd.f32 %v779, %v695
    %v788 = vadd.f32 %v780, %v697
    %v789 = vadd.f32 %v781, %v701
    %v790 = vadd.f32 %v782, %v703
    %791 = vrot.lane.b32.xlu0 %v707, 127
    %v792 = vpop.permute.xlu0 %791
    %793 = vrot.lane.b32.xlu0 %v713, 127
    %v794 = vpop.permute.xlu0 %793
    %795 = vrot.lane.b32.xlu0 %v719, 127
    %v796 = vpop.permute.xlu0 %795
    %797 = vrot.lane.b32.xlu0 %v725, 127
    %v798 = vpop.permute.xlu0 %797
    %799 = vrot.lane.b32.xlu0 %v709, 127
    %v800 = vpop.permute.xlu0 %799
    %801 = vrot.lane.b32.xlu0 %v715, 127
    %v802 = vpop.permute.xlu0 %801
    %803 = vrot.lane.b32.xlu0 %v721, 127
    %v804 = vpop.permute.xlu0 %803
    %805 = vrot.lane.b32.xlu0 %v727, 127
    %v806 = vpop.permute.xlu0 %805
    %vm807 = vcmp.lt.s32.totalorder %v397, 127
    %v808 = vsel %vm807, %v792, %v800
    %v809 = vsel %vm807, %v794, %v802
    %v810 = vsel %vm807, %v796, %v804
    %v811 = vsel %vm807, %v798, %v806
    %v812 = vsel %vm807, %v800, %v792
    %v813 = vsel %vm807, %v802, %v794
    %v814 = vsel %vm807, %v804, %v796
    %v815 = vsel %vm807, %v806, %v798
    %s816 = scalar_lea.vmem %s4, 10
    %v817 = vld [vmem:[%s816] sm:$0x3]
    %v819 = vlaneseq
    %v820 = vshrl.u32 %v819, 7
    %v821 = vsub.s32 0, %v820
    %v822 = vrot.slane %v817, %v821
    %v823 = vlaneseq
    %v824 = vshrl.u32 %v823, 7
    %v825 = vsub.s32 1, %v824
    %v826 = vrot.slane %v817, %v825
    %v829 = vmul.f32 %v808, %v822
    %v830 = vmul.f32 %v812, %v826
    %v831 = vmul.f32 %v809, %v822
    %v832 = vmul.f32 %v813, %v826
    %v833 = vmul.f32 %v810, %v822
    %v834 = vmul.f32 %v814, %v826
    %v835 = vmul.f32 %v811, %v822
    %v836 = vmul.f32 %v815, %v826
    %v837 = vadd.f32 %v783, %v829
    %v838 = vadd.f32 %v784, %v830
    %v839 = vadd.f32 %v785, %v831
    %v840 = vadd.f32 %v786, %v832
    %v841 = vadd.f32 %v787, %v833
    %v842 = vadd.f32 %v788, %v834
    %v843 = vadd.f32 %v789, %v835
    %v844 = vadd.f32 %v790, %v836
    %s845 = scalar_lea.vmem %s5, 192
    %v846 = vld [vmem:[%s845] sm:$0xff]
    %v847 = vld [vmem:[%s845 + $0x8] sm:$0xff]
    %v848 = vld [vmem:[%s845 + $0x10] sm:$0xff]
    %v849 = vld [vmem:[%s845 + $0x18] sm:$0xff]
    %v850 = vld [vmem:[%s845 + $0x20] sm:$0xff]
    %v851 = vld [vmem:[%s845 + $0x28] sm:$0xff]
    %v852 = vld [vmem:[%s845 + $0x30] sm:$0xff]
    %v853 = vld [vmem:[%s845 + $0x38] sm:$0xff]
    %v854 = vld [vmem:[%s845 + $0x40] sm:$0xff]
    %v855 = vld [vmem:[%s845 + $0x48] sm:$0xff]
    %v856 = vld [vmem:[%s845 + $0x50] sm:$0xff]
    %v857 = vld [vmem:[%s845 + $0x58] sm:$0xff]
    %v859 = vsel %vm57, %v846, 0
    %v862 = vsel %vm57, %v847, 0
    %v865 = vsel %vm57, %v848, 0
    %v868 = vsel %vm57, %v849, 0
    %v871 = vsel %vm57, %v850, 0
    %v874 = vsel %vm57, %v851, 0
    %v877 = vsel %vm57, %v852, 0
    %v880 = vsel %vm57, %v853, 0
    %v883 = vsel %vm57, %v854, 0
    %v886 = vsel %vm57, %v855, 0
    %v889 = vsel %vm57, %v856, 0
    %v892 = vsel %vm57, %v857, 0
    %894 = vmatprep.subr.mxu0 0.0
    %895 = vmatpush1.msra.mxu0 0.0
    %896 = vmatprep.subr.mxu0 0.0
    %897 = vmatpush1.msra.mxu0 0.0
    %898 = vmatprep.subr.mxu0 0.0
    %899 = vmatpush1.msra.mxu0 0.0
    %900 = vmatprep.subr.mxu0 0.0
    %901 = vmatpush1.msra.mxu0 0.0
    %902 = vmatprep.subr.mxu0 0.0
    %903 = vmatpush1.msra.mxu0 0.0
    %904 = vmatprep.subr.mxu0 0.0
    %905 = vmatpush1.msra.mxu0 0.0
    %906 = vmatprep.subr.mxu0 0.0
    %907 = vmatpush1.msra.mxu0 0.0
    %908 = vmatprep.subr.mxu0 0.0
    %909 = vmatpush1.msra.mxu0 0.0
    %910 = vmatprep.subr.mxu0 %v193
    %911 = vmatpush1.msra.mxu0 %v191
    %912 = vmatprep.subr.mxu0 %v187
    %913 = vmatpush1.msra.mxu0 %v185
    %914 = vmatprep.subr.mxu0 %v181
    %915 = vmatpush1.msra.mxu0 %v179
    %916 = vmatprep.subr.mxu0 %v175
    %917 = vmatpush1.msra.mxu0 %v173
    %918 = vmatprep.subr.mxu0 %v169
    %919 = vmatpush1.msra.mxu0 %v167
    %920 = vmatprep.subr.mxu0 %v163
    %921 = vmatpush1.msra.mxu0 %v161
    %922 = vmatprep.subr.mxu0 %v157
    %923 = vmatpush1.msra.mxu0 %v155
    %924 = vmatprep.subr.mxu0 %v151
    %925 = vmatpush1.msra.mxu0 %v149
    %926 = vmatprep.subr.mxu0 0.0
    %927 = vmatpush2.msra.mxu0 0.0
    %928 = vmatprep.subr.mxu0 0.0
    %929 = vmatpush2.msra.mxu0 0.0
    %930 = vmatprep.subr.mxu0 0.0
    %931 = vmatpush2.msra.mxu0 0.0
    %932 = vmatprep.subr.mxu0 0.0
    %933 = vmatpush2.msra.mxu0 0.0
    %934 = vmatprep.subr.mxu0 0.0
    %935 = vmatpush2.msra.mxu0 0.0
    %936 = vmatprep.subr.mxu0 0.0
    %937 = vmatpush2.msra.mxu0 0.0
    %938 = vmatprep.subr.mxu0 0.0
    %939 = vmatpush2.msra.mxu0 0.0
    %940 = vmatprep.subr.mxu0 0.0
    %941 = vmatpush2.msra.mxu0 0.0
    %942 = vmatprep.subr.mxu0 0.0
    %943 = vmatpush2.msra.mxu0 0.0
    %944 = vmatprep.subr.mxu0 0.0
    %945 = vmatpush2.msra.mxu0 0.0
    %946 = vmatprep.subr.mxu0 0.0
    %947 = vmatpush2.msra.mxu0 0.0
    %948 = vmatprep.subr.mxu0 0.0
    %949 = vmatpush2.msra.mxu0 0.0
    %950 = vmatprep.subr.mxu0 0.0
    %951 = vmatpush2.msra.mxu0 0.0
    %952 = vmatprep.subr.mxu0 0.0
    %953 = vmatpush2.msra.mxu0 0.0
    %954 = vmatprep.subr.mxu0 0.0
    %955 = vmatpush2.msra.mxu0 0.0
    %956 = vmatprep.subr.mxu0 0.0
    %957 = vmatpush2.msra.mxu0 0.0
    %958 = vmatprep.mubr.f32.mxu0 0.0
    %959 = vmatmul.mubr.f32.gmra.mxu0 %v859
    %v960 = vpop.f32.mrf.mxu0
    %v961 = vadd.f32 0.0, %v960
    %v962 = vpop.f32.mrf.mxu0
    %v963 = vadd.f32 0.0, %v962
    %964 = vmatprep.mubr.f32.mxu0 0.0
    %965 = vmatmul.mubr.f32.gmra.mxu0 %v862
    %v966 = vpop.f32.mrf.mxu0
    %v967 = vadd.f32 0.0, %v966
    %v968 = vpop.f32.mrf.mxu0
    %v969 = vadd.f32 0.0, %v968
    %970 = vmatprep.mubr.f32.mxu0 0.0
    %971 = vmatmul.mubr.f32.gmra.mxu0 %v865
    %v972 = vpop.f32.mrf.mxu0
    %v973 = vadd.f32 0.0, %v972
    %v974 = vpop.f32.mrf.mxu0
    %v975 = vadd.f32 0.0, %v974
    %976 = vmatprep.mubr.f32.mxu0 0.0
    %977 = vmatmul.mubr.f32.gmra.mxu0 %v868
    %v978 = vpop.f32.mrf.mxu0
    %v979 = vadd.f32 0.0, %v978
    %v980 = vpop.f32.mrf.mxu0
    %v981 = vadd.f32 0.0, %v980
    %982 = vmatprep.mubr.f32.mxu0 0.0
    %983 = vmatmul.mubr.f32.gmra.mxu0 %v871
    %v984 = vpop.f32.mrf.mxu0
    %v985 = vadd.f32 0.0, %v984
    %v986 = vpop.f32.mrf.mxu0
    %v987 = vadd.f32 0.0, %v986
    %988 = vmatprep.mubr.f32.mxu0 0.0
    %989 = vmatmul.mubr.f32.gmra.mxu0 %v874
    %v990 = vpop.f32.mrf.mxu0
    %v991 = vadd.f32 0.0, %v990
    %v992 = vpop.f32.mrf.mxu0
    %v993 = vadd.f32 0.0, %v992
    %994 = vmatprep.mubr.f32.mxu0 0.0
    %995 = vmatmul.mubr.f32.gmra.mxu0 %v877
    %v996 = vpop.f32.mrf.mxu0
    %v997 = vadd.f32 0.0, %v996
    %v998 = vpop.f32.mrf.mxu0
    %v999 = vadd.f32 0.0, %v998
    %1000 = vmatprep.mubr.f32.mxu0 0.0
    %1001 = vmatmul.mubr.f32.gmra.mxu0 %v880
    %v1002 = vpop.f32.mrf.mxu0
    %v1003 = vadd.f32 0.0, %v1002
    %v1004 = vpop.f32.mrf.mxu0
    %v1005 = vadd.f32 0.0, %v1004
    %1006 = vmatprep.mubr.f32.mxu0 0.0
    %1007 = vmatmul.mubr.f32.gmra.mxu0 %v883
    %v1008 = vpop.f32.mrf.mxu0
    %v1009 = vadd.f32 0.0, %v1008
    %v1010 = vpop.f32.mrf.mxu0
    %v1011 = vadd.f32 0.0, %v1010
    %1012 = vmatprep.mubr.f32.mxu0 0.0
    %1013 = vmatmul.mubr.f32.gmra.mxu0 %v886
    %v1014 = vpop.f32.mrf.mxu0
    %v1015 = vadd.f32 0.0, %v1014
    %v1016 = vpop.f32.mrf.mxu0
    %v1017 = vadd.f32 0.0, %v1016
    %1018 = vmatprep.mubr.f32.mxu0 0.0
    %1019 = vmatmul.mubr.f32.gmra.mxu0 %v889
    %v1020 = vpop.f32.mrf.mxu0
    %v1021 = vadd.f32 0.0, %v1020
    %v1022 = vpop.f32.mrf.mxu0
    %v1023 = vadd.f32 0.0, %v1022
    %1024 = vmatprep.mubr.f32.mxu0 0.0
    %1025 = vmatmul.mubr.f32.gmra.mxu0 %v892
    %v1026 = vpop.f32.mrf.mxu0
    %v1027 = vadd.f32 0.0, %v1026
    %v1028 = vpop.f32.mrf.mxu0
    %v1029 = vadd.f32 0.0, %v1028
    %1030 = vdwg.mxu0
    %1031 = vrot.lane.b32.xlu0 %v961, 113
    %v1032 = vpop.permute.xlu0 %1031
    %1033 = vrot.lane.b32.xlu0 %v967, 113
    %v1034 = vpop.permute.xlu0 %1033
    %1035 = vrot.lane.b32.xlu0 %v973, 113
    %v1036 = vpop.permute.xlu0 %1035
    %1037 = vrot.lane.b32.xlu0 %v979, 113
    %v1038 = vpop.permute.xlu0 %1037
    %1039 = vrot.lane.b32.xlu0 %v963, 113
    %v1040 = vpop.permute.xlu0 %1039
    %1041 = vrot.lane.b32.xlu0 %v969, 113
    %v1042 = vpop.permute.xlu0 %1041
    %1043 = vrot.lane.b32.xlu0 %v975, 113
    %v1044 = vpop.permute.xlu0 %1043
    %1045 = vrot.lane.b32.xlu0 %v981, 113
    %v1046 = vpop.permute.xlu0 %1045
    %vm1047 = vcmp.lt.s32.totalorder %v397, 113
    %v1048 = vsel %vm1047, %v1032, %v1040
    %v1049 = vsel %vm1047, %v1034, %v1042
    %v1050 = vsel %vm1047, %v1036, %v1044
    %v1051 = vsel %vm1047, %v1038, %v1046
    %v1052 = vsel %vm1047, %v1040, %v1032
    %v1053 = vsel %vm1047, %v1042, %v1034
    %v1054 = vsel %vm1047, %v1044, %v1036
    %v1055 = vsel %vm1047, %v1046, %v1038
    %s1056 = scalar_lea.vmem %s4, 12
    %v1057 = vld [vmem:[%s1056] sm:$0x3]
    %v1059 = vlaneseq
    %v1060 = vshrl.u32 %v1059, 7
    %v1061 = vsub.s32 0, %v1060
    %v1062 = vrot.slane %v1057, %v1061
    %v1063 = vlaneseq
    %v1064 = vshrl.u32 %v1063, 7
    %v1065 = vsub.s32 1, %v1064
    %v1066 = vrot.slane %v1057, %v1065
    %v1069 = vmul.f32 %v1048, %v1062
    %v1070 = vmul.f32 %v1052, %v1066
    %v1071 = vmul.f32 %v1049, %v1062
    %v1072 = vmul.f32 %v1053, %v1066
    %v1073 = vmul.f32 %v1050, %v1062
    %v1074 = vmul.f32 %v1054, %v1066
    %v1075 = vmul.f32 %v1051, %v1062
    %v1076 = vmul.f32 %v1055, %v1066
    %v1077 = vadd.f32 %v837, %v1069
    %v1078 = vadd.f32 %v838, %v1070
    %v1079 = vadd.f32 %v839, %v1071
    %v1080 = vadd.f32 %v840, %v1072
    %v1081 = vadd.f32 %v841, %v1073
    %v1082 = vadd.f32 %v842, %v1074
    %v1083 = vadd.f32 %v843, %v1075
    %v1084 = vadd.f32 %v844, %v1076
    %1085 = vrot.lane.b32.xlu0 %v985, 112
    %v1086 = vpop.permute.xlu0 %1085
    %1087 = vrot.lane.b32.xlu0 %v991, 112
    %v1088 = vpop.permute.xlu0 %1087
    %1089 = vrot.lane.b32.xlu0 %v997, 112
    %v1090 = vpop.permute.xlu0 %1089
    %1091 = vrot.lane.b32.xlu0 %v1003, 112
    %v1092 = vpop.permute.xlu0 %1091
    %1093 = vrot.lane.b32.xlu0 %v987, 112
    %v1094 = vpop.permute.xlu0 %1093
    %1095 = vrot.lane.b32.xlu0 %v993, 112
    %v1096 = vpop.permute.xlu0 %1095
    %1097 = vrot.lane.b32.xlu0 %v999, 112
    %v1098 = vpop.permute.xlu0 %1097
    %1099 = vrot.lane.b32.xlu0 %v1005, 112
    %v1100 = vpop.permute.xlu0 %1099
    %vm1101 = vcmp.lt.s32.totalorder %v397, 112
    %v1102 = vsel %vm1101, %v1086, %v1094
    %v1103 = vsel %vm1101, %v1088, %v1096
    %v1104 = vsel %vm1101, %v1090, %v1098
    %v1105 = vsel %vm1101, %v1092, %v1100
    %v1106 = vsel %vm1101, %v1094, %v1086
    %v1107 = vsel %vm1101, %v1096, %v1088
    %v1108 = vsel %vm1101, %v1098, %v1090
    %v1109 = vsel %vm1101, %v1100, %v1092
    %s1110 = scalar_lea.vmem %s4, 14
    %v1111 = vld [vmem:[%s1110] sm:$0x3]
    %v1113 = vlaneseq
    %v1114 = vshrl.u32 %v1113, 7
    %v1115 = vsub.s32 0, %v1114
    %v1116 = vrot.slane %v1111, %v1115
    %v1117 = vlaneseq
    %v1118 = vshrl.u32 %v1117, 7
    %v1119 = vsub.s32 1, %v1118
    %v1120 = vrot.slane %v1111, %v1119
    %v1123 = vmul.f32 %v1102, %v1116
    %v1124 = vmul.f32 %v1106, %v1120
    %v1125 = vmul.f32 %v1103, %v1116
    %v1126 = vmul.f32 %v1107, %v1120
    %v1127 = vmul.f32 %v1104, %v1116
    %v1128 = vmul.f32 %v1108, %v1120
    %v1129 = vmul.f32 %v1105, %v1116
    %v1130 = vmul.f32 %v1109, %v1120
    %v1131 = vadd.f32 %v1077, %v1123
    %v1132 = vadd.f32 %v1078, %v1124
    %v1133 = vadd.f32 %v1079, %v1125
    %v1134 = vadd.f32 %v1080, %v1126
    %v1135 = vadd.f32 %v1081, %v1127
    %v1136 = vadd.f32 %v1082, %v1128
    %v1137 = vadd.f32 %v1083, %v1129
    %v1138 = vadd.f32 %v1084, %v1130
    %1139 = vrot.lane.b32.xlu0 %v1009, 111
    %v1140 = vpop.permute.xlu0 %1139
    %1141 = vrot.lane.b32.xlu0 %v1015, 111
    %v1142 = vpop.permute.xlu0 %1141
    %1143 = vrot.lane.b32.xlu0 %v1021, 111
    %v1144 = vpop.permute.xlu0 %1143
    %1145 = vrot.lane.b32.xlu0 %v1027, 111
    %v1146 = vpop.permute.xlu0 %1145
    %1147 = vrot.lane.b32.xlu0 %v1011, 111
    %v1148 = vpop.permute.xlu0 %1147
    %1149 = vrot.lane.b32.xlu0 %v1017, 111
    %v1150 = vpop.permute.xlu0 %1149
    %1151 = vrot.lane.b32.xlu0 %v1023, 111
    %v1152 = vpop.permute.xlu0 %1151
    %1153 = vrot.lane.b32.xlu0 %v1029, 111
    %v1154 = vpop.permute.xlu0 %1153
    %vm1155 = vcmp.lt.s32.totalorder %v397, 111
    %v1156 = vsel %vm1155, %v1140, %v1148
    %v1157 = vsel %vm1155, %v1142, %v1150
    %v1158 = vsel %vm1155, %v1144, %v1152
    %v1159 = vsel %vm1155, %v1146, %v1154
    %v1160 = vsel %vm1155, %v1148, %v1140
    %v1161 = vsel %vm1155, %v1150, %v1142
    %v1162 = vsel %vm1155, %v1152, %v1144
    %v1163 = vsel %vm1155, %v1154, %v1146
    %s1164 = scalar_lea.vmem %s4, 16
    %v1165 = vld [vmem:[%s1164] sm:$0x3]
    %v1167 = vlaneseq
    %v1168 = vshrl.u32 %v1167, 7
    %v1169 = vsub.s32 0, %v1168
    %v1170 = vrot.slane %v1165, %v1169
    %v1171 = vlaneseq
    %v1172 = vshrl.u32 %v1171, 7
    %v1173 = vsub.s32 1, %v1172
    %v1174 = vrot.slane %v1165, %v1173
    %v1177 = vmul.f32 %v1156, %v1170
    %v1178 = vmul.f32 %v1160, %v1174
    %v1179 = vmul.f32 %v1157, %v1170
    %v1180 = vmul.f32 %v1161, %v1174
    %v1181 = vmul.f32 %v1158, %v1170
    %v1182 = vmul.f32 %v1162, %v1174
    %v1183 = vmul.f32 %v1159, %v1170
    %v1184 = vmul.f32 %v1163, %v1174
    %v1185 = vadd.f32 %v1131, %v1177
    %v1186 = vadd.f32 %v1132, %v1178
    %v1187 = vadd.f32 %v1133, %v1179
    %v1188 = vadd.f32 %v1134, %v1180
    %v1189 = vadd.f32 %v1135, %v1181
    %v1190 = vadd.f32 %v1136, %v1182
    %v1191 = vadd.f32 %v1137, %v1183
    %v1192 = vadd.f32 %v1138, %v1184
    %v1193 = vld [vmem:[%s6] sm:$0xff]
    %v1194 = vld [vmem:[%s6 + $0x8] sm:$0xff]
    %v1195 = vld [vmem:[%s6 + $0x10] sm:$0xff]
    %v1196 = vld [vmem:[%s6 + $0x18] sm:$0xff]
    %1198 = vset.pattern.permute.xlu0 0
    %1199 = vperm.xlu0 %1198, %v1193
    %v1200 = vpop.permute.xlu0 %1199
    %1203 = vset.pattern.permute.xlu0 0
    %1204 = vperm.xlu0 %1203, %v1194
    %v1205 = vpop.permute.xlu0 %1204
    %1208 = vset.pattern.permute.xlu0 0
    %1209 = vperm.xlu0 %1208, %v1195
    %v1210 = vpop.permute.xlu0 %1209
    %1213 = vset.pattern.permute.xlu0 0
    %1214 = vperm.xlu0 %1213, %v1196
    %v1215 = vpop.permute.xlu0 %1214
    %v1217 = vadd.f32 %v1185, %v1200
    %v1218 = vadd.f32 %v1186, %v1200
    %v1219 = vadd.f32 %v1187, %v1205
    %v1220 = vadd.f32 %v1188, %v1205
    %v1221 = vadd.f32 %v1189, %v1210
    %v1222 = vadd.f32 %v1190, %v1210
    %v1223 = vadd.f32 %v1191, %v1215
    %v1224 = vadd.f32 %v1192, %v1215
    %v1225 = vmax.f32 %v1217, 0.0
    %v1226 = vmax.f32 %v1218, 0.0
    %v1227 = vmax.f32 %v1219, 0.0
    %v1228 = vmax.f32 %v1220, 0.0
    %v1229 = vmax.f32 %v1221, 0.0
    %v1230 = vmax.f32 %v1222, 0.0
    %v1231 = vmax.f32 %v1223, 0.0
    %v1232 = vmax.f32 %v1224, 0.0
    %v1233 = vld [vmem:[%s7] sm:$0xff]
    %v1234 = vld [vmem:[%s7 + $0x8] sm:$0xff]
    %v1235 = vld [vmem:[%s7 + $0x10] sm:$0xff]
    %v1236 = vld [vmem:[%s7 + $0x18] sm:$0xff]
    %v1237 = vld [vmem:[%s7 + $0x20] sm:$0xff]
    %v1238 = vld [vmem:[%s7 + $0x28] sm:$0xff]
    %v1239 = vld [vmem:[%s7 + $0x30] sm:$0xff]
    %v1240 = vld [vmem:[%s7 + $0x38] sm:$0xff]
    %v1241 = vld [vmem:[%s8] sm:$0xff]
    %v1242 = vld [vmem:[%s8 + $0x8] sm:$0xff]
    %v1243 = vld [vmem:[%s8 + $0x10] sm:$0xff]
    %v1244 = vld [vmem:[%s8 + $0x18] sm:$0xff]
    %v1245 = vld [vmem:[%s8 + $0x20] sm:$0xff]
    %v1246 = vld [vmem:[%s8 + $0x28] sm:$0xff]
    %v1247 = vld [vmem:[%s8 + $0x30] sm:$0xff]
    %v1248 = vld [vmem:[%s8 + $0x38] sm:$0xff]
    %v1249 = vld [vmem:[%s1] sm:$0xff]
    %v1250 = vld [vmem:[%s1 + $0x8] sm:$0xff]
    %v1251 = vld [vmem:[%s1 + $0x10] sm:$0xff]
    %v1252 = vld [vmem:[%s1 + $0x18] sm:$0xff]
    %v1253 = vld [vmem:[%s1 + $0x20] sm:$0xff]
    %v1254 = vld [vmem:[%s1 + $0x28] sm:$0xff]
    %v1255 = vld [vmem:[%s1 + $0x30] sm:$0xff]
    %v1256 = vld [vmem:[%s1 + $0x38] sm:$0xff]
    %v1257 = vld [vmem:[%s1 + $0x40] sm:$0xff]
    %v1258 = vld [vmem:[%s1 + $0x48] sm:$0xff]
    %vm1259 = vcmask 654336
    %v1261 = vsel %vm1259, %v1241, 0
    %v1264 = vsel %vm1259, %v1242, 0
    %v1267 = vsel %vm1259, %v1243, 0
    %v1270 = vsel %vm1259, %v1244, 0
    %v1273 = vsel %vm1259, %v1245, 0
    %v1276 = vsel %vm1259, %v1246, 0
    %v1279 = vsel %vm1259, %v1247, 0
    %v1282 = vsel %vm1259, %v1248, 0
    %1284 = vmatprep.subr.mxu0 0.0
    %1285 = vmatpush1.msra.mxu0 0.0
    %1286 = vmatprep.subr.mxu0 0.0
    %1287 = vmatpush1.msra.mxu0 0.0
    %1288 = vmatprep.subr.mxu0 0.0
    %1289 = vmatpush1.msra.mxu0 0.0
    %1290 = vmatprep.subr.mxu0 0.0
    %1291 = vmatpush1.msra.mxu0 0.0
    %1292 = vmatprep.subr.mxu0 0.0
    %1293 = vmatpush1.msra.mxu0 0.0
    %1294 = vmatprep.subr.mxu0 0.0
    %1295 = vmatpush1.msra.mxu0 0.0
    %1296 = vmatprep.subr.mxu0 0.0
    %1297 = vmatpush1.msra.mxu0 %v1258
    %1298 = vmatprep.subr.mxu0 0.0
    %1299 = vmatpush1.msra.mxu0 %v1257
    %1300 = vmatprep.subr.mxu0 0.0
    %1301 = vmatpush1.msra.mxu0 %v1256
    %1302 = vmatprep.subr.mxu0 0.0
    %1303 = vmatpush1.msra.mxu0 %v1255
    %1304 = vmatprep.subr.mxu0 0.0
    %1305 = vmatpush1.msra.mxu0 %v1254
    %1306 = vmatprep.subr.mxu0 0.0
    %1307 = vmatpush1.msra.mxu0 %v1253
    %1308 = vmatprep.subr.mxu0 0.0
    %1309 = vmatpush1.msra.mxu0 %v1252
    %1310 = vmatprep.subr.mxu0 0.0
    %1311 = vmatpush1.msra.mxu0 %v1251
    %1312 = vmatprep.subr.mxu0 0.0
    %1313 = vmatpush1.msra.mxu0 %v1250
    %1314 = vmatprep.subr.mxu0 0.0
    %1315 = vmatpush1.msra.mxu0 %v1249
    %1316 = vmatprep.subr.mxu0 0.0
    %1317 = vmatpush2.msra.mxu0 0.0
    %1318 = vmatprep.subr.mxu0 0.0
    %1319 = vmatpush2.msra.mxu0 0.0
    %1320 = vmatprep.subr.mxu0 0.0
    %1321 = vmatpush2.msra.mxu0 0.0
    %1322 = vmatprep.subr.mxu0 0.0
    %1323 = vmatpush2.msra.mxu0 0.0
    %1324 = vmatprep.subr.mxu0 0.0
    %1325 = vmatpush2.msra.mxu0 0.0
    %1326 = vmatprep.subr.mxu0 0.0
    %1327 = vmatpush2.msra.mxu0 0.0
    %1328 = vmatprep.subr.mxu0 0.0
    %1329 = vmatpush2.msra.mxu0 0.0
    %1330 = vmatprep.subr.mxu0 0.0
    %1331 = vmatpush2.msra.mxu0 0.0
    %1332 = vmatprep.subr.mxu0 0.0
    %1333 = vmatpush2.msra.mxu0 0.0
    %1334 = vmatprep.subr.mxu0 0.0
    %1335 = vmatpush2.msra.mxu0 0.0
    %1336 = vmatprep.subr.mxu0 0.0
    %1337 = vmatpush2.msra.mxu0 0.0
    %1338 = vmatprep.subr.mxu0 0.0
    %1339 = vmatpush2.msra.mxu0 0.0
    %1340 = vmatprep.subr.mxu0 0.0
    %1341 = vmatpush2.msra.mxu0 0.0
    %1342 = vmatprep.subr.mxu0 0.0
    %1343 = vmatpush2.msra.mxu0 0.0
    %1344 = vmatprep.subr.mxu0 0.0
    %1345 = vmatpush2.msra.mxu0 0.0
    %1346 = vmatprep.subr.mxu0 0.0
    %1347 = vmatpush2.msra.mxu0 0.0
    %1348 = vmatprep.mubr.f32.mxu0 0.0
    %1349 = vmatmul.mubr.f32.gmra.mxu0 %v1261
    %v1350 = vpop.f32.mrf.mxu0
    %v1351 = vadd.f32 0.0, %v1350
    %v1352 = vpop.f32.mrf.mxu0
    %1353 = vmatprep.mubr.f32.mxu0 0.0
    %1354 = vmatmul.mubr.f32.gmra.mxu0 %v1264
    %v1355 = vpop.f32.mrf.mxu0
    %v1356 = vadd.f32 0.0, %v1355
    %v1357 = vpop.f32.mrf.mxu0
    %1358 = vmatprep.mubr.f32.mxu0 0.0
    %1359 = vmatmul.mubr.f32.gmra.mxu0 %v1267
    %v1360 = vpop.f32.mrf.mxu0
    %v1361 = vadd.f32 0.0, %v1360
    %v1362 = vpop.f32.mrf.mxu0
    %1363 = vmatprep.mubr.f32.mxu0 0.0
    %1364 = vmatmul.mubr.f32.gmra.mxu0 %v1270
    %v1365 = vpop.f32.mrf.mxu0
    %v1366 = vadd.f32 0.0, %v1365
    %v1367 = vpop.f32.mrf.mxu0
    %1368 = vmatprep.mubr.f32.mxu0 0.0
    %1369 = vmatmul.mubr.f32.gmra.mxu0 %v1273
    %v1370 = vpop.f32.mrf.mxu0
    %v1371 = vadd.f32 0.0, %v1370
    %v1372 = vpop.f32.mrf.mxu0
    %1373 = vmatprep.mubr.f32.mxu0 0.0
    %1374 = vmatmul.mubr.f32.gmra.mxu0 %v1276
    %v1375 = vpop.f32.mrf.mxu0
    %v1376 = vadd.f32 0.0, %v1375
    %v1377 = vpop.f32.mrf.mxu0
    %1378 = vmatprep.mubr.f32.mxu0 0.0
    %1379 = vmatmul.mubr.f32.gmra.mxu0 %v1279
    %v1380 = vpop.f32.mrf.mxu0
    %v1381 = vadd.f32 0.0, %v1380
    %v1382 = vpop.f32.mrf.mxu0
    %1383 = vmatprep.mubr.f32.mxu0 0.0
    %1384 = vmatmul.mubr.f32.gmra.mxu0 %v1282
    %v1385 = vpop.f32.mrf.mxu0
    %v1386 = vadd.f32 0.0, %v1385
    %v1387 = vpop.f32.mrf.mxu0
    %1388 = vdwg.mxu0
    %v1389 = vld [vmem:[%s3] sm:$0xff]
    %v1390 = vld [vmem:[%s3 + $0x8] sm:$0xff]
    %v1391 = vld [vmem:[%s3 + $0x10] sm:$0xff]
    %v1392 = vld [vmem:[%s3 + $0x18] sm:$0xff]
    %v1393 = vld [vmem:[%s3 + $0x20] sm:$0xff]
    %v1394 = vld [vmem:[%s3 + $0x28] sm:$0xff]
    %v1395 = vld [vmem:[%s3 + $0x30] sm:$0xff]
    %v1396 = vld [vmem:[%s3 + $0x38] sm:$0xff]
    %v1397 = vld [vmem:[%s3 + $0x40] sm:$0xff]
    %v1398 = vld [vmem:[%s3 + $0x48] sm:$0xff]
    %v1399 = vld [vmem:[%s3 + $0x50] sm:$0xff]
    %v1400 = vld [vmem:[%s3 + $0x58] sm:$0xff]
    %v1401 = vld [vmem:[%s3 + $0x60] sm:$0xff]
    %v1402 = vld [vmem:[%s3 + $0x68] sm:$0xff]
    %v1403 = vld [vmem:[%s3 + $0x70] sm:$0xff]
    %v1404 = vld [vmem:[%s3 + $0x78] sm:$0xff]
    %v1406 = vsel %vm57, %v1351, 0
    %v1409 = vsel %vm57, %v1356, 0
    %v1412 = vsel %vm57, %v1361, 0
    %v1415 = vsel %vm57, %v1366, 0
    %v1418 = vsel %vm57, %v1371, 0
    %v1421 = vsel %vm57, %v1376, 0
    %v1424 = vsel %vm57, %v1381, 0
    %v1427 = vsel %vm57, %v1386, 0
    %1429 = vmatprep.subr.mxu0 0.0
    %1430 = vmatpush1.msra.mxu0 0.0
    %1431 = vmatprep.subr.mxu0 0.0
    %1432 = vmatpush1.msra.mxu0 0.0
    %1433 = vmatprep.subr.mxu0 0.0
    %1434 = vmatpush1.msra.mxu0 0.0
    %1435 = vmatprep.subr.mxu0 0.0
    %1436 = vmatpush1.msra.mxu0 0.0
    %1437 = vmatprep.subr.mxu0 0.0
    %1438 = vmatpush1.msra.mxu0 0.0
    %1439 = vmatprep.subr.mxu0 0.0
    %1440 = vmatpush1.msra.mxu0 0.0
    %1441 = vmatprep.subr.mxu0 0.0
    %1442 = vmatpush1.msra.mxu0 0.0
    %1443 = vmatprep.subr.mxu0 0.0
    %1444 = vmatpush1.msra.mxu0 0.0
    %1445 = vmatprep.subr.mxu0 %v1404
    %1446 = vmatpush1.msra.mxu0 %v1403
    %1447 = vmatprep.subr.mxu0 %v1402
    %1448 = vmatpush1.msra.mxu0 %v1401
    %1449 = vmatprep.subr.mxu0 %v1400
    %1450 = vmatpush1.msra.mxu0 %v1399
    %1451 = vmatprep.subr.mxu0 %v1398
    %1452 = vmatpush1.msra.mxu0 %v1397
    %1453 = vmatprep.subr.mxu0 %v1396
    %1454 = vmatpush1.msra.mxu0 %v1395
    %1455 = vmatprep.subr.mxu0 %v1394
    %1456 = vmatpush1.msra.mxu0 %v1393
    %1457 = vmatprep.subr.mxu0 %v1392
    %1458 = vmatpush1.msra.mxu0 %v1391
    %1459 = vmatprep.subr.mxu0 %v1390
    %1460 = vmatpush1.msra.mxu0 %v1389
    %1461 = vmatprep.subr.mxu0 0.0
    %1462 = vmatpush2.msra.mxu0 0.0
    %1463 = vmatprep.subr.mxu0 0.0
    %1464 = vmatpush2.msra.mxu0 0.0
    %1465 = vmatprep.subr.mxu0 0.0
    %1466 = vmatpush2.msra.mxu0 0.0
    %1467 = vmatprep.subr.mxu0 0.0
    %1468 = vmatpush2.msra.mxu0 0.0
    %1469 = vmatprep.subr.mxu0 0.0
    %1470 = vmatpush2.msra.mxu0 0.0
    %1471 = vmatprep.subr.mxu0 0.0
    %1472 = vmatpush2.msra.mxu0 0.0
    %1473 = vmatprep.subr.mxu0 0.0
    %1474 = vmatpush2.msra.mxu0 0.0
    %1475 = vmatprep.subr.mxu0 0.0
    %1476 = vmatpush2.msra.mxu0 0.0
    %1477 = vmatprep.subr.mxu0 0.0
    %1478 = vmatpush2.msra.mxu0 0.0
    %1479 = vmatprep.subr.mxu0 0.0
    %1480 = vmatpush2.msra.mxu0 0.0
    %1481 = vmatprep.subr.mxu0 0.0
    %1482 = vmatpush2.msra.mxu0 0.0
    %1483 = vmatprep.subr.mxu0 0.0
    %1484 = vmatpush2.msra.mxu0 0.0
    %1485 = vmatprep.subr.mxu0 0.0
    %1486 = vmatpush2.msra.mxu0 0.0
    %1487 = vmatprep.subr.mxu0 0.0
    %1488 = vmatpush2.msra.mxu0 0.0
    %1489 = vmatprep.subr.mxu0 0.0
    %1490 = vmatpush2.msra.mxu0 0.0
    %1491 = vmatprep.subr.mxu0 0.0
    %1492 = vmatpush2.msra.mxu0 0.0
    %1493 = vmatprep.mubr.f32.mxu0 0.0
    %1494 = vmatmul.mubr.f32.gmra.mxu0 %v1406
    %v1495 = vpop.f32.mrf.mxu0
    %v1496 = vadd.f32 0.0, %v1495
    %v1497 = vpop.f32.mrf.mxu0
    %v1498 = vadd.f32 0.0, %v1497
    %1499 = vmatprep.mubr.f32.mxu0 0.0
    %1500 = vmatmul.mubr.f32.gmra.mxu0 %v1409
    %v1501 = vpop.f32.mrf.mxu0
    %v1502 = vadd.f32 0.0, %v1501
    %v1503 = vpop.f32.mrf.mxu0
    %v1504 = vadd.f32 0.0, %v1503
    %1505 = vmatprep.mubr.f32.mxu0 0.0
    %1506 = vmatmul.mubr.f32.gmra.mxu0 %v1412
    %v1507 = vpop.f32.mrf.mxu0
    %v1508 = vadd.f32 0.0, %v1507
    %v1509 = vpop.f32.mrf.mxu0
    %v1510 = vadd.f32 0.0, %v1509
    %1511 = vmatprep.mubr.f32.mxu0 0.0
    %1512 = vmatmul.mubr.f32.gmra.mxu0 %v1415
    %v1513 = vpop.f32.mrf.mxu0
    %v1514 = vadd.f32 0.0, %v1513
    %v1515 = vpop.f32.mrf.mxu0
    %v1516 = vadd.f32 0.0, %v1515
    %1517 = vmatprep.mubr.f32.mxu0 0.0
    %1518 = vmatmul.mubr.f32.gmra.mxu0 %v1418
    %v1519 = vpop.f32.mrf.mxu0
    %v1520 = vadd.f32 0.0, %v1519
    %v1521 = vpop.f32.mrf.mxu0
    %v1522 = vadd.f32 0.0, %v1521
    %1523 = vmatprep.mubr.f32.mxu0 0.0
    %1524 = vmatmul.mubr.f32.gmra.mxu0 %v1421
    %v1525 = vpop.f32.mrf.mxu0
    %v1526 = vadd.f32 0.0, %v1525
    %v1527 = vpop.f32.mrf.mxu0
    %v1528 = vadd.f32 0.0, %v1527
    %1529 = vmatprep.mubr.f32.mxu0 0.0
    %1530 = vmatmul.mubr.f32.gmra.mxu0 %v1424
    %v1531 = vpop.f32.mrf.mxu0
    %v1532 = vadd.f32 0.0, %v1531
    %v1533 = vpop.f32.mrf.mxu0
    %v1534 = vadd.f32 0.0, %v1533
    %1535 = vmatprep.mubr.f32.mxu0 0.0
    %1536 = vmatmul.mubr.f32.gmra.mxu0 %v1427
    %v1537 = vpop.f32.mrf.mxu0
    %v1538 = vadd.f32 0.0, %v1537
    %v1539 = vpop.f32.mrf.mxu0
    %v1540 = vadd.f32 0.0, %v1539
    %1541 = vdwg.mxu0
    %vm1542 = vcmask 261120
    %v1544 = vsel %vm1542, %v1233, 0
    %v1547 = vsel %vm1542, %v1234, 0
    %v1550 = vsel %vm1542, %v1235, 0
    %v1553 = vsel %vm1542, %v1236, 0
    %v1556 = vsel %vm1542, %v1237, 0
    %v1559 = vsel %vm1542, %v1238, 0
    %v1562 = vsel %vm1542, %v1239, 0
    %v1565 = vsel %vm1542, %v1240, 0
    %1567 = vmatprep.subr.mxu0 0.0
    %1568 = vmatpush1.msra.mxu0 0.0
    %1569 = vmatprep.subr.mxu0 0.0
    %1570 = vmatpush1.msra.mxu0 0.0
    %1571 = vmatprep.subr.mxu0 0.0
    %1572 = vmatpush1.msra.mxu0 0.0
    %1573 = vmatprep.subr.mxu0 0.0
    %1574 = vmatpush1.msra.mxu0 0.0
    %1575 = vmatprep.subr.mxu0 0.0
    %1576 = vmatpush1.msra.mxu0 0.0
    %1577 = vmatprep.subr.mxu0 0.0
    %1578 = vmatpush1.msra.mxu0 0.0
    %1579 = vmatprep.subr.mxu0 0.0
    %1580 = vmatpush1.msra.mxu0 0.0
    %1581 = vmatprep.subr.mxu0 0.0
    %1582 = vmatpush1.msra.mxu0 0.0
    %1583 = vmatprep.subr.mxu0 0.0
    %1584 = vmatpush1.msra.mxu0 0.0
    %1585 = vmatprep.subr.mxu0 0.0
    %1586 = vmatpush1.msra.mxu0 0.0
    %1587 = vmatprep.subr.mxu0 0.0
    %1588 = vmatpush1.msra.mxu0 0.0
    %1589 = vmatprep.subr.mxu0 0.0
    %1590 = vmatpush1.msra.mxu0 0.0
    %1591 = vmatprep.subr.mxu0 %v1232
    %1592 = vmatpush1.msra.mxu0 %v1231
    %1593 = vmatprep.subr.mxu0 %v1230
    %1594 = vmatpush1.msra.mxu0 %v1229
    %1595 = vmatprep.subr.mxu0 %v1228
    %1596 = vmatpush1.msra.mxu0 %v1227
    %1597 = vmatprep.subr.mxu0 %v1226
    %1598 = vmatpush1.msra.mxu0 %v1225
    %1599 = vmatprep.subr.mxu0 0.0
    %1600 = vmatpush2.msra.mxu0 0.0
    %1601 = vmatprep.subr.mxu0 0.0
    %1602 = vmatpush2.msra.mxu0 0.0
    %1603 = vmatprep.subr.mxu0 0.0
    %1604 = vmatpush2.msra.mxu0 0.0
    %1605 = vmatprep.subr.mxu0 0.0
    %1606 = vmatpush2.msra.mxu0 0.0
    %1607 = vmatprep.subr.mxu0 0.0
    %1608 = vmatpush2.msra.mxu0 0.0
    %1609 = vmatprep.subr.mxu0 0.0
    %1610 = vmatpush2.msra.mxu0 0.0
    %1611 = vmatprep.subr.mxu0 0.0
    %1612 = vmatpush2.msra.mxu0 0.0
    %1613 = vmatprep.subr.mxu0 0.0
    %1614 = vmatpush2.msra.mxu0 0.0
    %1615 = vmatprep.subr.mxu0 0.0
    %1616 = vmatpush2.msra.mxu0 0.0
    %1617 = vmatprep.subr.mxu0 0.0
    %1618 = vmatpush2.msra.mxu0 0.0
    %1619 = vmatprep.subr.mxu0 0.0
    %1620 = vmatpush2.msra.mxu0 0.0
    %1621 = vmatprep.subr.mxu0 0.0
    %1622 = vmatpush2.msra.mxu0 0.0
    %1623 = vmatprep.subr.mxu0 0.0
    %1624 = vmatpush2.msra.mxu0 0.0
    %1625 = vmatprep.subr.mxu0 0.0
    %1626 = vmatpush2.msra.mxu0 0.0
    %1627 = vmatprep.subr.mxu0 0.0
    %1628 = vmatpush2.msra.mxu0 0.0
    %1629 = vmatprep.subr.mxu0 0.0
    %1630 = vmatpush2.msra.mxu0 0.0
    %1631 = vmatprep.mubr.f32.mxu0 0.0
    %1632 = vmatmul.mubr.f32.gmra.mxu0 %v1544
    %v1633 = vpop.f32.mrf.mxu0
    %v1634 = vadd.f32 %v1496, %v1633
    %v1635 = vpop.f32.mrf.mxu0
    %v1636 = vadd.f32 %v1498, %v1635
    %1637 = vmatprep.mubr.f32.mxu0 0.0
    %1638 = vmatmul.mubr.f32.gmra.mxu0 %v1547
    %v1639 = vpop.f32.mrf.mxu0
    %v1640 = vadd.f32 %v1502, %v1639
    %v1641 = vpop.f32.mrf.mxu0
    %v1642 = vadd.f32 %v1504, %v1641
    %1643 = vmatprep.mubr.f32.mxu0 0.0
    %1644 = vmatmul.mubr.f32.gmra.mxu0 %v1550
    %v1645 = vpop.f32.mrf.mxu0
    %v1646 = vadd.f32 %v1508, %v1645
    %v1647 = vpop.f32.mrf.mxu0
    %v1648 = vadd.f32 %v1510, %v1647
    %1649 = vmatprep.mubr.f32.mxu0 0.0
    %1650 = vmatmul.mubr.f32.gmra.mxu0 %v1553
    %v1651 = vpop.f32.mrf.mxu0
    %v1652 = vadd.f32 %v1514, %v1651
    %v1653 = vpop.f32.mrf.mxu0
    %v1654 = vadd.f32 %v1516, %v1653
    %1655 = vmatprep.mubr.f32.mxu0 0.0
    %1656 = vmatmul.mubr.f32.gmra.mxu0 %v1556
    %v1657 = vpop.f32.mrf.mxu0
    %v1658 = vadd.f32 %v1520, %v1657
    %v1659 = vpop.f32.mrf.mxu0
    %v1660 = vadd.f32 %v1522, %v1659
    %1661 = vmatprep.mubr.f32.mxu0 0.0
    %1662 = vmatmul.mubr.f32.gmra.mxu0 %v1559
    %v1663 = vpop.f32.mrf.mxu0
    %v1664 = vadd.f32 %v1526, %v1663
    %v1665 = vpop.f32.mrf.mxu0
    %v1666 = vadd.f32 %v1528, %v1665
    %1667 = vmatprep.mubr.f32.mxu0 0.0
    %1668 = vmatmul.mubr.f32.gmra.mxu0 %v1562
    %v1669 = vpop.f32.mrf.mxu0
    %v1670 = vadd.f32 %v1532, %v1669
    %v1671 = vpop.f32.mrf.mxu0
    %v1672 = vadd.f32 %v1534, %v1671
    %1673 = vmatprep.mubr.f32.mxu0 0.0
    %1674 = vmatmul.mubr.f32.gmra.mxu0 %v1565
    %v1675 = vpop.f32.mrf.mxu0
    %v1676 = vadd.f32 %v1538, %v1675
    %v1677 = vpop.f32.mrf.mxu0
    %v1678 = vadd.f32 %v1540, %v1677
    %1679 = vdwg.mxu0
    %v1680 = vmax.f32 %v1634, 0.0
    %v1681 = vmax.f32 %v1636, 0.0
    %v1682 = vmax.f32 %v1640, 0.0
    %v1683 = vmax.f32 %v1642, 0.0
    %v1684 = vmax.f32 %v1646, 0.0
    %v1685 = vmax.f32 %v1648, 0.0
    %v1686 = vmax.f32 %v1652, 0.0
    %v1687 = vmax.f32 %v1654, 0.0
    %v1688 = vmax.f32 %v1658, 0.0
    %v1689 = vmax.f32 %v1660, 0.0
    %v1690 = vmax.f32 %v1664, 0.0
    %v1691 = vmax.f32 %v1666, 0.0
    %v1692 = vmax.f32 %v1670, 0.0
    %v1693 = vmax.f32 %v1672, 0.0
    %v1694 = vmax.f32 %v1676, 0.0
    %v1695 = vmax.f32 %v1678, 0.0
    %1696 = vst [vmem:[#allocation2] sm:$0xff] %v1680
    %1697 = vst [vmem:[#allocation2 + $0x8] sm:$0xff] %v1681
    %1698 = vst [vmem:[#allocation2 + $0x10] sm:$0xff] %v1682
    %1699 = vst [vmem:[#allocation2 + $0x18] sm:$0xff] %v1683
    %1700 = vst [vmem:[#allocation2 + $0x20] sm:$0xff] %v1684
    %1701 = vst [vmem:[#allocation2 + $0x28] sm:$0xff] %v1685
    %1702 = vst [vmem:[#allocation2 + $0x30] sm:$0xff] %v1686
    %1703 = vst [vmem:[#allocation2 + $0x38] sm:$0xff] %v1687
    %1704 = vst [vmem:[#allocation2 + $0x40] sm:$0xff] %v1688
    %1705 = vst [vmem:[#allocation2 + $0x48] sm:$0xff] %v1689
    %1706 = vst [vmem:[#allocation2 + $0x50] sm:$0xff] %v1690
    %1707 = vst [vmem:[#allocation2 + $0x58] sm:$0xff] %v1691
    %1708 = vst [vmem:[#allocation2 + $0x60] sm:$0xff] %v1692
    %1709 = vst [vmem:[#allocation2 + $0x68] sm:$0xff] %v1693
    %1710 = vst [vmem:[#allocation2 + $0x70] sm:$0xff] %v1694
    %1711 = vst [vmem:[#allocation2 + $0x78] sm:$0xff] %v1695
    // Predicated region
    $region38: #{tpu_custom_call.1} parent=1 // pred_check
      _
    $region39: #{tpu_custom_call.1} parent=1 // pred_check_branch
      %1713 = sbr.rel (0) target = $region41
    $region40: #{tpu_custom_call.1} parent=1 // pred_region
      %s1715 = ssub.s32 2048, 2048
      %1716 = vsyncadd [#allocation3], %s1715
      %s1717 = sshll.u32 [#allocation2], 4
      %s1718 = int_to_ptr.vmem [resolvable:$true] %s1717
      %1723 = dma.vmem_to_hbm [thread:$0]  %s1718, 2048, %s9, [#allocation3], 256, 256, 16
    $region41: #{tpu_custom_call.1} parent=1 // pred_fallthru
      _
    // Predicated region
    $region42: #{tpu_custom_call.1} parent=1 // pred_check
      _
    $region43: #{tpu_custom_call.1} parent=1 // pred_check_branch
      %1725 = sbr.rel (0) target = $region45
    $region44: #{tpu_custom_call.1} parent=1 // pred_region
      %1726 = dma.done [#allocation3], 2048
    $region45: #{tpu_custom_call.1} parent=1 // pred_fallthru
      _
    %1727 = vsyncpa [#allocation3], 1

</llo_original>
